<compile_context>
chip_gen: v6e
topology: v6e:2x2x1
jax: 0.10.0
libtpu: 0.0.40
codegen_flags: <defaults>
</compile_context>

<pallas_src>
import numpy as np

import jax
import jax.numpy as jnp
from jax.experimental import pallas as pl
from jax.experimental.pallas import tpu as pltpu


def _stable_sigmoid(x):
    # numerically stable sigmoid: never exponentiates a large positive argument
    z = jnp.exp(-jnp.abs(x))
    return jnp.where(x >= 0, 1.0 / (1.0 + z), z / (1.0 + z))


# ------------------- fused head kernel (one batch element x one Ho tile) -------------------
def head_kernel(w_ref, b_ref, sp_ref, x_ref, uh_ref, uwt_ref, o_ref):
    # w_ref : (K, C)    SMEM scalars    b_ref : (1, K) SMEM scalars
    # sp_ref: (1, C)    SMEM scalars    (= sigmoid(prototype), hoisted to wrapper)
    # x_ref : (C, H, W) VMEM
    # uh_ref: (Ho_t, H) VMEM            uwt_ref: (W, Wo) VMEM (resident across grid)
    # o_ref : (K, Ho_t, Wo) VMEM
    K, C = w_ref.shape
    H, W = x_ref.shape[1], x_ref.shape[2]

    x = x_ref[...].astype(jnp.float32)                        # (C, H, W)

    # distance planes: |sigmoid(x_c) - sigmoid(p_c)|   (VPU + EUP; C, K tiny & static)
    d = [jnp.abs(_stable_sigmoid(x[c]) - sp_ref[0, c]) for c in range(C)]

    # 1x1 conv on the VPU: per-class scalar-weighted plane FMAs
    ys = []
    for k in range(K):
        y_k = jnp.full((H, W), b_ref[0, k], jnp.float32)
        for c in range(C):
            y_k = y_k + w_ref[k, c] * d[c]
        ys.append(y_k)

    # Stage 1 of bilinear x16 upsample, batched over classes on the MXU:
    #   (K*H, W) @ (W, Wo) -> (K*H, Wo)   (lane-dense intermediate)
    Ys = jnp.concatenate(ys, axis=0)                          # sublane stack, relayout-free
    uwt = uwt_ref[...].astype(jnp.float32)                    # (W, Wo)
    T = jnp.dot(Ys, uwt, preferred_element_type=jnp.float32)  # (K*H, Wo)

    # Stage 2: (Ho_t, H) @ (H, Wo) per class; sublane slices at multiples of H.
    uh_t = uh_ref[...].astype(jnp.float32)                    # (Ho_t, H)
    for k in range(K):
        o_ref[k] = jnp.dot(uh_t, T[k * H:(k + 1) * H],
                           preferred_element_type=jnp.float32).astype(o_ref.dtype)


def make_bilinear_matrix_np(n_in, n_out):
    """1-D bilinear interpolation matrix (n_out, n_in), align_corners=True (host numpy)."""
    if n_in == 1:
        return np.ones((n_out, 1), np.float32)
    dst = np.arange(n_out, dtype=np.float64)
    src = dst * (n_in - 1) / (n_out - 1)
    i0 = np.clip(np.floor(src).astype(np.int64), 0, n_in - 2)
    frac = (src - i0).astype(np.float32)
    m = np.zeros((n_out, n_in), np.float32)
    rows = np.arange(n_out)
    m[rows, i0] += 1.0 - frac
    m[rows, i0 + 1] += frac
    return m


def _pick_row_tile(ho):
    # Largest "nice" output-row tile: keeps blocks <= ~384 KiB (K=3, f32) and gives the
    # pipeline multiple steps; 128 rows keeps per-step overhead negligible on v5e/v6e.
    for t in (128, 64, 32, 16, 8):
        if ho % t == 0:
            return t
    return ho


def classification_head_forward(prototype, x, conv_w, conv_b, scale=16, out_dtype=None):
    """prototype: (C,)  x: (N, C, H, W)  conv_w: (K, C, 1, 1)  conv_b: (K,)"""
    N, C, H, W = x.shape
    K = conv_w.shape[0]
    Ho, Wo = H * scale, W * scale
    Ho_t = _pick_row_tile(Ho)
    out_dtype = x.dtype if out_dtype is None else out_dtype   # bf16 here halves HBM writeback

    # Pure-metadata reshapes + host-side constants only; no device scatters/transposes.
    w2 = conv_w.reshape(K, C)                                  # -> SMEM scalars
    b2 = conv_b.reshape(1, K)                                  # -> SMEM scalars
    sp = jax.nn.sigmoid(prototype.astype(jnp.float32)).reshape(1, C)   # -> SMEM scalars
    uh = jnp.asarray(make_bilinear_matrix_np(H, Ho))           # (Ho, H)
    uwt = jnp.asarray(make_bilinear_matrix_np(W, Wo).T)        # (W, Wo), pre-transposed

    return pl.pallas_call(
        head_kernel,
        out_shape=jax.ShapeDtypeStruct((N, K, Ho, Wo), out_dtype),
        grid_spec=pltpu.PrefetchScalarGridSpec(
            num_scalar_prefetch=0,
            grid=(N, Ho // Ho_t),
            in_specs=[
                pl.BlockSpec((K, C), lambda n, j: (0, 0),
                             memory_space=pltpu.MemorySpace.SMEM),
                pl.BlockSpec((1, K), lambda n, j: (0, 0),
                             memory_space=pltpu.MemorySpace.SMEM),
                pl.BlockSpec((1, C), lambda n, j: (0, 0),
                             memory_space=pltpu.MemorySpace.SMEM),
                pl.BlockSpec((None, C, H, W), lambda n, j: (n, 0, 0, 0)),
                pl.BlockSpec((Ho_t, H), lambda n, j: (j, 0)),
                pl.BlockSpec((W, Wo), lambda n, j: (0, 0)),
            ],
            out_specs=pl.BlockSpec((None, K, Ho_t, Wo), lambda n, j: (n, 0, j, 0)),
        ),
        compiler_params=pltpu.CompilerParams(
            dimension_semantics=("parallel", "parallel")),
    )(w2, b2, sp, x, uh, uwt)


# ---------------- pure-JAX reference for verification ----------------
def reference_forward(prototype, x, conv_w, conv_b, scale=16):
    N, C, H, W = x.shape
    K = conv_w.shape[0]
    p = prototype.reshape(1, C, 1, 1)
    d = jnp.abs(jax.nn.sigmoid(x) - jax.nn.sigmoid(p))
    y = jnp.einsum('nchw,kc->nkhw', d, conv_w.reshape(K, C)) + conv_b.reshape(1, K, 1, 1)
    uh = jnp.asarray(make_bilinear_matrix_np(H, H * scale))
    uw = jnp.asarray(make_bilinear_matrix_np(W, W * scale))
    return jnp.einsum('oh,nkhw,pw->nkop', uh, y, uw)


if __name__ == "__main__":
    key = jax.random.PRNGKey(0)
    k1, k2, k3, k4 = jax.random.split(key, 4)

    N, C, H, W, K = 2, 4, 16, 16, 3   # feat_dim=4, num_classes=3
    x = jax.random.normal(k1, (N, C, H, W), jnp.float32)
    prototype = jax.random.normal(k2, (C,), jnp.float32)
    # deterministic synthetic Conv2d(feat_dim, num_classes, 1) params
    conv_w = jax.random.normal(k3, (K, C, 1, 1), jnp.float32) * 0.5
    conv_b = jax.random.normal(k4, (K,), jnp.float32) * 0.1

    out = classification_head_forward(prototype, x, conv_w, conv_b)
    out = jax.block_until_ready(out)

    assert out.shape == (N, K, H * 16, W * 16), out.shape
    ref = reference_forward(prototype, x, conv_w, conv_b)
    max_err = float(jnp.max(jnp.abs(out - ref)))
    assert max_err < 1e-4, f"max_err={max_err}"

    print("KERNEL_OK")
</pallas_src>

<mosaic_0001>
module attributes {stable_mosaic.version = 11 : i64} {
  func.func @head_kernel(%arg0: i32, %arg1: i32, %arg2: memref<3x4xf32, #tpu.memory_space<smem>>, %arg3: memref<1x3xf32, #tpu.memory_space<smem>>, %arg4: memref<1x4xf32, #tpu.memory_space<smem>>, %arg5: memref<1x4x16x16xf32, #tpu.memory_space<vmem>>, %arg6: memref<128x16xf32, #tpu.memory_space<vmem>>, %arg7: memref<16x256xf32, #tpu.memory_space<vmem>>, %arg8: memref<1x3x128x256xf32, #tpu.memory_space<vmem>>) attributes {dimension_semantics = [#tpu.dimension_semantics<parallel>, #tpu.dimension_semantics<parallel>], iteration_bounds = array<i64: 2, 2>, scalar_prefetch = 0 : i64, scratch_operands = 0 : i64, tpu.core_type = #tpu.core_type<tc>, window_params = [{transform_indices = @transform_0, window_bounds = array<i64: 3, 4>}, {transform_indices = @transform_1, window_bounds = array<i64: 1, 3>}, {transform_indices = @transform_2, window_bounds = array<i64: 1, 4>}, {transform_indices = @transform_3, window_bounds = array<i64: 1, 4, 16, 16>}, {transform_indices = @transform_4, window_bounds = array<i64: 128, 16>}, {pipeline_mode = #tpu.pipeline_mode<synchronous>, transform_indices = @transform_5, window_bounds = array<i64: 16, 256>}, {transform_indices = @transform_6, window_bounds = array<i64: 1, 3, 128, 256>}]} {
    %c0 = arith.constant 0 : index
    %c0_0 = arith.constant 0 : index
    %c0_1 = arith.constant 0 : index
    %c0_2 = arith.constant 0 : index
    %0 = vector.load %arg5[%c0, %c0_0, %c0_1, %c0_2] : memref<1x4x16x16xf32, #tpu.memory_space<vmem>>, vector<1x4x16x16xf32>
    %1 = vector.shape_cast %0 : vector<1x4x16x16xf32> to vector<4x16x16xf32>
    %2 = vector.extract_strided_slice %1 {offsets = [0, 0, 0], sizes = [1, 16, 16], strides = [1, 1, 1]} : vector<4x16x16xf32> to vector<1x16x16xf32>
    %3 = vector.shape_cast %2 : vector<1x16x16xf32> to vector<16x16xf32>
    %4 = math.absf %3 : vector<16x16xf32>
    %cst = arith.constant 0.000000e+00 : f32
    %5 = vector.broadcast %cst : f32 to vector<16x16xf32>
    %6 = arith.subf %5, %4 : vector<16x16xf32>
    %7 = math.exp %6 : vector<16x16xf32>
    %cst_3 = arith.constant 0.000000e+00 : f32
    %8 = vector.broadcast %cst_3 : f32 to vector<16x16xf32>
    %9 = arith.cmpf oge, %3, %8 : vector<16x16xf32>
    %cst_4 = arith.constant 1.000000e+00 : f32
    %10 = vector.broadcast %cst_4 : f32 to vector<16x16xf32>
    %11 = arith.addf %10, %7 : vector<16x16xf32>
    %cst_5 = arith.constant 1.000000e+00 : f32
    %12 = vector.broadcast %cst_5 : f32 to vector<16x16xf32>
    %13 = arith.divf %12, %11 : vector<16x16xf32>
    %cst_6 = arith.constant 1.000000e+00 : f32
    %14 = vector.broadcast %cst_6 : f32 to vector<16x16xf32>
    %15 = arith.addf %14, %7 : vector<16x16xf32>
    %16 = arith.divf %7, %15 : vector<16x16xf32>
    %17 = arith.select %9, %13, %16 : vector<16x16xi1>, vector<16x16xf32>
    %c0_7 = arith.constant 0 : index
    %c0_8 = arith.constant 0 : index
    %18 = memref.load %arg4[%c0_7, %c0_8] : memref<1x4xf32, #tpu.memory_space<smem>>
    %19 = vector.broadcast %18 : f32 to vector<16x16xf32>
    %20 = arith.subf %17, %19 : vector<16x16xf32>
    %21 = math.absf %20 : vector<16x16xf32>
    %22 = vector.extract_strided_slice %1 {offsets = [1, 0, 0], sizes = [1, 16, 16], strides = [1, 1, 1]} : vector<4x16x16xf32> to vector<1x16x16xf32>
    %23 = vector.shape_cast %22 : vector<1x16x16xf32> to vector<16x16xf32>
    %24 = math.absf %23 : vector<16x16xf32>
    %cst_9 = arith.constant 0.000000e+00 : f32
    %25 = vector.broadcast %cst_9 : f32 to vector<16x16xf32>
    %26 = arith.subf %25, %24 : vector<16x16xf32>
    %27 = math.exp %26 : vector<16x16xf32>
    %cst_10 = arith.constant 0.000000e+00 : f32
    %28 = vector.broadcast %cst_10 : f32 to vector<16x16xf32>
    %29 = arith.cmpf oge, %23, %28 : vector<16x16xf32>
    %cst_11 = arith.constant 1.000000e+00 : f32
    %30 = vector.broadcast %cst_11 : f32 to vector<16x16xf32>
    %31 = arith.addf %30, %27 : vector<16x16xf32>
    %cst_12 = arith.constant 1.000000e+00 : f32
    %32 = vector.broadcast %cst_12 : f32 to vector<16x16xf32>
    %33 = arith.divf %32, %31 : vector<16x16xf32>
    %cst_13 = arith.constant 1.000000e+00 : f32
    %34 = vector.broadcast %cst_13 : f32 to vector<16x16xf32>
    %35 = arith.addf %34, %27 : vector<16x16xf32>
    %36 = arith.divf %27, %35 : vector<16x16xf32>
    %37 = arith.select %29, %33, %36 : vector<16x16xi1>, vector<16x16xf32>
    %c0_14 = arith.constant 0 : index
    %c1 = arith.constant 1 : index
    %38 = memref.load %arg4[%c0_14, %c1] : memref<1x4xf32, #tpu.memory_space<smem>>
    %39 = vector.broadcast %38 : f32 to vector<16x16xf32>
    %40 = arith.subf %37, %39 : vector<16x16xf32>
    %41 = math.absf %40 : vector<16x16xf32>
    %42 = vector.extract_strided_slice %1 {offsets = [2, 0, 0], sizes = [1, 16, 16], strides = [1, 1, 1]} : vector<4x16x16xf32> to vector<1x16x16xf32>
    %43 = vector.shape_cast %42 : vector<1x16x16xf32> to vector<16x16xf32>
    %44 = math.absf %43 : vector<16x16xf32>
    %cst_15 = arith.constant 0.000000e+00 : f32
    %45 = vector.broadcast %cst_15 : f32 to vector<16x16xf32>
    %46 = arith.subf %45, %44 : vector<16x16xf32>
    %47 = math.exp %46 : vector<16x16xf32>
    %cst_16 = arith.constant 0.000000e+00 : f32
    %48 = vector.broadcast %cst_16 : f32 to vector<16x16xf32>
    %49 = arith.cmpf oge, %43, %48 : vector<16x16xf32>
    %cst_17 = arith.constant 1.000000e+00 : f32
    %50 = vector.broadcast %cst_17 : f32 to vector<16x16xf32>
    %51 = arith.addf %50, %47 : vector<16x16xf32>
    %cst_18 = arith.constant 1.000000e+00 : f32
    %52 = vector.broadcast %cst_18 : f32 to vector<16x16xf32>
    %53 = arith.divf %52, %51 : vector<16x16xf32>
    %cst_19 = arith.constant 1.000000e+00 : f32
    %54 = vector.broadcast %cst_19 : f32 to vector<16x16xf32>
    %55 = arith.addf %54, %47 : vector<16x16xf32>
    %56 = arith.divf %47, %55 : vector<16x16xf32>
    %57 = arith.select %49, %53, %56 : vector<16x16xi1>, vector<16x16xf32>
    %c0_20 = arith.constant 0 : index
    %c2 = arith.constant 2 : index
    %58 = memref.load %arg4[%c0_20, %c2] : memref<1x4xf32, #tpu.memory_space<smem>>
    %59 = vector.broadcast %58 : f32 to vector<16x16xf32>
    %60 = arith.subf %57, %59 : vector<16x16xf32>
    %61 = math.absf %60 : vector<16x16xf32>
    %62 = vector.extract_strided_slice %1 {offsets = [3, 0, 0], sizes = [1, 16, 16], strides = [1, 1, 1]} : vector<4x16x16xf32> to vector<1x16x16xf32>
    %63 = vector.shape_cast %62 : vector<1x16x16xf32> to vector<16x16xf32>
    %64 = math.absf %63 : vector<16x16xf32>
    %cst_21 = arith.constant 0.000000e+00 : f32
    %65 = vector.broadcast %cst_21 : f32 to vector<16x16xf32>
    %66 = arith.subf %65, %64 : vector<16x16xf32>
    %67 = math.exp %66 : vector<16x16xf32>
    %cst_22 = arith.constant 0.000000e+00 : f32
    %68 = vector.broadcast %cst_22 : f32 to vector<16x16xf32>
    %69 = arith.cmpf oge, %63, %68 : vector<16x16xf32>
    %cst_23 = arith.constant 1.000000e+00 : f32
    %70 = vector.broadcast %cst_23 : f32 to vector<16x16xf32>
    %71 = arith.addf %70, %67 : vector<16x16xf32>
    %cst_24 = arith.constant 1.000000e+00 : f32
    %72 = vector.broadcast %cst_24 : f32 to vector<16x16xf32>
    %73 = arith.divf %72, %71 : vector<16x16xf32>
    %cst_25 = arith.constant 1.000000e+00 : f32
    %74 = vector.broadcast %cst_25 : f32 to vector<16x16xf32>
    %75 = arith.addf %74, %67 : vector<16x16xf32>
    %76 = arith.divf %67, %75 : vector<16x16xf32>
    %77 = arith.select %69, %73, %76 : vector<16x16xi1>, vector<16x16xf32>
    %c0_26 = arith.constant 0 : index
    %c3 = arith.constant 3 : index
    %78 = memref.load %arg4[%c0_26, %c3] : memref<1x4xf32, #tpu.memory_space<smem>>
    %79 = vector.broadcast %78 : f32 to vector<16x16xf32>
    %80 = arith.subf %77, %79 : vector<16x16xf32>
    %81 = math.absf %80 : vector<16x16xf32>
    %c0_27 = arith.constant 0 : index
    %c0_28 = arith.constant 0 : index
    %82 = memref.load %arg3[%c0_27, %c0_28] : memref<1x3xf32, #tpu.memory_space<smem>>
    %83 = vector.broadcast %82 : f32 to vector<16x16xf32>
    %c0_29 = arith.constant 0 : index
    %c0_30 = arith.constant 0 : index
    %84 = memref.load %arg2[%c0_29, %c0_30] : memref<3x4xf32, #tpu.memory_space<smem>>
    %85 = vector.broadcast %84 : f32 to vector<16x16xf32>
    %86 = arith.mulf %85, %21 : vector<16x16xf32>
    %87 = arith.addf %83, %86 : vector<16x16xf32>
    %c0_31 = arith.constant 0 : index
    %c1_32 = arith.constant 1 : index
    %88 = memref.load %arg2[%c0_31, %c1_32] : memref<3x4xf32, #tpu.memory_space<smem>>
    %89 = vector.broadcast %88 : f32 to vector<16x16xf32>
    %90 = arith.mulf %89, %41 : vector<16x16xf32>
    %91 = arith.addf %87, %90 : vector<16x16xf32>
    %c0_33 = arith.constant 0 : index
    %c2_34 = arith.constant 2 : index
    %92 = memref.load %arg2[%c0_33, %c2_34] : memref<3x4xf32, #tpu.memory_space<smem>>
    %93 = vector.broadcast %92 : f32 to vector<16x16xf32>
    %94 = arith.mulf %93, %61 : vector<16x16xf32>
    %95 = arith.addf %91, %94 : vector<16x16xf32>
    %c0_35 = arith.constant 0 : index
    %c3_36 = arith.constant 3 : index
    %96 = memref.load %arg2[%c0_35, %c3_36] : memref<3x4xf32, #tpu.memory_space<smem>>
    %97 = vector.broadcast %96 : f32 to vector<16x16xf32>
    %98 = arith.mulf %97, %81 : vector<16x16xf32>
    %99 = arith.addf %95, %98 : vector<16x16xf32>
    %c0_37 = arith.constant 0 : index
    %c1_38 = arith.constant 1 : index
    %100 = memref.load %arg3[%c0_37, %c1_38] : memref<1x3xf32, #tpu.memory_space<smem>>
    %101 = vector.broadcast %100 : f32 to vector<16x16xf32>
    %c1_39 = arith.constant 1 : index
    %c0_40 = arith.constant 0 : index
    %102 = memref.load %arg2[%c1_39, %c0_40] : memref<3x4xf32, #tpu.memory_space<smem>>
    %103 = vector.broadcast %102 : f32 to vector<16x16xf32>
    %104 = arith.mulf %103, %21 : vector<16x16xf32>
    %105 = arith.addf %101, %104 : vector<16x16xf32>
    %c1_41 = arith.constant 1 : index
    %c1_42 = arith.constant 1 : index
    %106 = memref.load %arg2[%c1_41, %c1_42] : memref<3x4xf32, #tpu.memory_space<smem>>
    %107 = vector.broadcast %106 : f32 to vector<16x16xf32>
    %108 = arith.mulf %107, %41 : vector<16x16xf32>
    %109 = arith.addf %105, %108 : vector<16x16xf32>
    %c1_43 = arith.constant 1 : index
    %c2_44 = arith.constant 2 : index
    %110 = memref.load %arg2[%c1_43, %c2_44] : memref<3x4xf32, #tpu.memory_space<smem>>
    %111 = vector.broadcast %110 : f32 to vector<16x16xf32>
    %112 = arith.mulf %111, %61 : vector<16x16xf32>
    %113 = arith.addf %109, %112 : vector<16x16xf32>
    %c1_45 = arith.constant 1 : index
    %c3_46 = arith.constant 3 : index
    %114 = memref.load %arg2[%c1_45, %c3_46] : memref<3x4xf32, #tpu.memory_space<smem>>
    %115 = vector.broadcast %114 : f32 to vector<16x16xf32>
    %116 = arith.mulf %115, %81 : vector<16x16xf32>
    %117 = arith.addf %113, %116 : vector<16x16xf32>
    %c0_47 = arith.constant 0 : index
    %c2_48 = arith.constant 2 : index
    %118 = memref.load %arg3[%c0_47, %c2_48] : memref<1x3xf32, #tpu.memory_space<smem>>
    %119 = vector.broadcast %118 : f32 to vector<16x16xf32>
    %c2_49 = arith.constant 2 : index
    %c0_50 = arith.constant 0 : index
    %120 = memref.load %arg2[%c2_49, %c0_50] : memref<3x4xf32, #tpu.memory_space<smem>>
    %121 = vector.broadcast %120 : f32 to vector<16x16xf32>
    %122 = arith.mulf %121, %21 : vector<16x16xf32>
    %123 = arith.addf %119, %122 : vector<16x16xf32>
    %c2_51 = arith.constant 2 : index
    %c1_52 = arith.constant 1 : index
    %124 = memref.load %arg2[%c2_51, %c1_52] : memref<3x4xf32, #tpu.memory_space<smem>>
    %125 = vector.broadcast %124 : f32 to vector<16x16xf32>
    %126 = arith.mulf %125, %41 : vector<16x16xf32>
    %127 = arith.addf %123, %126 : vector<16x16xf32>
    %c2_53 = arith.constant 2 : index
    %c2_54 = arith.constant 2 : index
    %128 = memref.load %arg2[%c2_53, %c2_54] : memref<3x4xf32, #tpu.memory_space<smem>>
    %129 = vector.broadcast %128 : f32 to vector<16x16xf32>
    %130 = arith.mulf %129, %61 : vector<16x16xf32>
    %131 = arith.addf %127, %130 : vector<16x16xf32>
    %c2_55 = arith.constant 2 : index
    %c3_56 = arith.constant 3 : index
    %132 = memref.load %arg2[%c2_55, %c3_56] : memref<3x4xf32, #tpu.memory_space<smem>>
    %133 = vector.broadcast %132 : f32 to vector<16x16xf32>
    %134 = arith.mulf %133, %81 : vector<16x16xf32>
    %135 = arith.addf %131, %134 : vector<16x16xf32>
    %136 = tpu.concatenate %99, %117, %135 in 0 : vector<16x16xf32>, vector<16x16xf32>, vector<16x16xf32> -> vector<48x16xf32>
    %c0_57 = arith.constant 0 : index
    %c0_58 = arith.constant 0 : index
    %137 = vector.load %arg7[%c0_57, %c0_58] : memref<16x256xf32, #tpu.memory_space<vmem>>, vector<16x256xf32>
    %cst_59 = arith.constant dense<0.000000e+00> : vector<48x256xf32>
    %138 = tpu.matmul %136, %137, %cst_59 {dimension_numbers = #tpu.dot_dimension_numbers<[1], [0], [0], [1], [0, 0, 1, 1], [], []>} : vector<48x16xf32>, vector<16x256xf32>, vector<48x256xf32> -> vector<48x256xf32>
    %c0_60 = arith.constant 0 : index
    %c0_61 = arith.constant 0 : index
    %139 = vector.load %arg6[%c0_60, %c0_61] : memref<128x16xf32, #tpu.memory_space<vmem>>, vector<128x16xf32>
    %140 = vector.extract_strided_slice %138 {offsets = [0, 0], sizes = [16, 256], strides = [1, 1]} : vector<48x256xf32> to vector<16x256xf32>
    %cst_62 = arith.constant dense<0.000000e+00> : vector<128x256xf32>
    %141 = tpu.matmul %139, %140, %cst_62 {dimension_numbers = #tpu.dot_dimension_numbers<[1], [0], [0], [1], [0, 0, 1, 1], [], []>} : vector<128x16xf32>, vector<16x256xf32>, vector<128x256xf32> -> vector<128x256xf32>
    %c0_63 = arith.constant 0 : index
    %c0_64 = arith.constant 0 : index
    %c0_65 = arith.constant 0 : index
    %c0_66 = arith.constant 0 : index
    %142 = vector.load %arg8[%c0_63, %c0_64, %c0_65, %c0_66] : memref<1x3x128x256xf32, #tpu.memory_space<vmem>>, vector<1x1x128x256xf32>
    %143 = vector.shape_cast %142 : vector<1x1x128x256xf32> to vector<128x256xf32>
    %144 = vector.shape_cast %141 : vector<128x256xf32> to vector<1x1x128x256xf32>
    tpu.vector_store %arg8[%c0_63, %c0_64, %c0_65, %c0_66], %144 {strides = array<i32>} : memref<1x3x128x256xf32, #tpu.memory_space<vmem>>, vector<1x1x128x256xf32>,
    %145 = vector.extract_strided_slice %138 {offsets = [16, 0], sizes = [16, 256], strides = [1, 1]} : vector<48x256xf32> to vector<16x256xf32>
    %cst_67 = arith.constant dense<0.000000e+00> : vector<128x256xf32>
    %146 = tpu.matmul %139, %145, %cst_67 {dimension_numbers = #tpu.dot_dimension_numbers<[1], [0], [0], [1], [0, 0, 1, 1], [], []>} : vector<128x16xf32>, vector<16x256xf32>, vector<128x256xf32> -> vector<128x256xf32>
    %c0_68 = arith.constant 0 : index
    %c1_69 = arith.constant 1 : index
    %c0_70 = arith.constant 0 : index
    %c0_71 = arith.constant 0 : index
    %147 = vector.load %arg8[%c0_68, %c1_69, %c0_70, %c0_71] : memref<1x3x128x256xf32, #tpu.memory_space<vmem>>, vector<1x1x128x256xf32>
    %148 = vector.shape_cast %147 : vector<1x1x128x256xf32> to vector<128x256xf32>
    %149 = vector.shape_cast %146 : vector<128x256xf32> to vector<1x1x128x256xf32>
    tpu.vector_store %arg8[%c0_68, %c1_69, %c0_70, %c0_71], %149 {strides = array<i32>} : memref<1x3x128x256xf32, #tpu.memory_space<vmem>>, vector<1x1x128x256xf32>,
    %150 = vector.extract_strided_slice %138 {offsets = [32, 0], sizes = [16, 256], strides = [1, 1]} : vector<48x256xf32> to vector<16x256xf32>
    %cst_72 = arith.constant dense<0.000000e+00> : vector<128x256xf32>
    %151 = tpu.matmul %139, %150, %cst_72 {dimension_numbers = #tpu.dot_dimension_numbers<[1], [0], [0], [1], [0, 0, 1, 1], [], []>} : vector<128x16xf32>, vector<16x256xf32>, vector<128x256xf32> -> vector<128x256xf32>
    %c0_73 = arith.constant 0 : index
    %c2_74 = arith.constant 2 : index
    %c0_75 = arith.constant 0 : index
    %c0_76 = arith.constant 0 : index
    %152 = vector.load %arg8[%c0_73, %c2_74, %c0_75, %c0_76] : memref<1x3x128x256xf32, #tpu.memory_space<vmem>>, vector<1x1x128x256xf32>
    %153 = vector.shape_cast %152 : vector<1x1x128x256xf32> to vector<128x256xf32>
    %154 = vector.shape_cast %151 : vector<128x256xf32> to vector<1x1x128x256xf32>
    tpu.vector_store %arg8[%c0_73, %c2_74, %c0_75, %c0_76], %154 {strides = array<i32>} : memref<1x3x128x256xf32, #tpu.memory_space<vmem>>, vector<1x1x128x256xf32>,
    return
  }
  func.func @transform_0(%arg0: i32, %arg1: i32) -> (i32, i32) {
    %c0_i32 = arith.constant 0 : i32
    %c0_i32_0 = arith.constant 0 : i32
    %c0_i32_1 = arith.constant 0 : i32
    return %c0_i32, %c0_i32_0 : i32, i32
  }
  func.func @transform_1(%arg0: i32, %arg1: i32) -> (i32, i32) {
    %c0_i32 = arith.constant 0 : i32
    %c0_i32_0 = arith.constant 0 : i32
    %c0_i32_1 = arith.constant 0 : i32
    return %c0_i32, %c0_i32_0 : i32, i32
  }
  func.func @transform_2(%arg0: i32, %arg1: i32) -> (i32, i32) {
    %c0_i32 = arith.constant 0 : i32
    %c0_i32_0 = arith.constant 0 : i32
    %c0_i32_1 = arith.constant 0 : i32
    return %c0_i32, %c0_i32_0 : i32, i32
  }
  func.func @transform_3(%arg0: i32, %arg1: i32) -> (i32, i32, i32, i32) {
    %c0_i32 = arith.constant 0 : i32
    %c0_i32_0 = arith.constant 0 : i32
    %c0_i32_1 = arith.constant 0 : i32
    %c0_i32_2 = arith.constant 0 : i32
    return %arg0, %c0_i32, %c0_i32_0, %c0_i32_1 : i32, i32, i32, i32
  }
  func.func @transform_4(%arg0: i32, %arg1: i32) -> (i32, i32) {
    %c0_i32 = arith.constant 0 : i32
    %c0_i32_0 = arith.constant 0 : i32
    return %arg1, %c0_i32 : i32, i32
  }
  func.func @transform_5(%arg0: i32, %arg1: i32) -> (i32, i32) {
    %c0_i32 = arith.constant 0 : i32
    %c0_i32_0 = arith.constant 0 : i32
    %c0_i32_1 = arith.constant 0 : i32
    return %c0_i32, %c0_i32_0 : i32, i32
  }
  func.func @transform_6(%arg0: i32, %arg1: i32) -> (i32, i32, i32, i32) {
    %c0_i32 = arith.constant 0 : i32
    %c0_i32_0 = arith.constant 0 : i32
    %c0_i32_1 = arith.constant 0 : i32
    return %arg0, %c0_i32, %arg1, %c0_i32_0 : i32, i32, i32, i32
  }
}

</mosaic_0001>

<llo_original>
// kernel: tpu_custom_call.1
$region0: #{tpu_custom_call.1}
  #allocation0 [shape = 'u32[]', space=smem, size = 0x4, offset = 0x4, fixed_abs, tag = 'smem constant byte address 0x4 - core index']
  #allocation1 [shape = 'u32[144,128]{1,0:T(1,128)}', space=vmem, size = 0x12000, scoped, tag = 'internal scratch']
  #allocation13 [shape = 's32[]', space=sflag, size = 0x4, offset = 0, fixed_abs, tag = 'sflag constant byte address 0x0 - dummy sync flag']
  %s0 = inlined_call_operand.hbm [shape: f32[3,4], index: 0, kind: input, shape index: {}]
  %s1 = inlined_call_operand.hbm [shape: f32[1,3], index: 1, kind: input, shape index: {}]
  %s2 = inlined_call_operand.hbm [shape: f32[1,4], index: 2, kind: input, shape index: {}]
  %s3 = inlined_call_operand.hbm [shape: f32[2,4,16,16], index: 3, kind: input, shape index: {}]
  %s4 = inlined_call_operand.vmem [shape: f32[256,16], index: 4, kind: input, shape index: {}]
  %s5 = inlined_call_operand.hbm [shape: f32[16,256], index: 5, kind: input, shape index: {}]
  %s6 = inlined_call_operand.hbm [shape: f32[2,3,256,256], index: 6, kind: output, shape index: {}]
  %s7 = sld [smem:[#allocation0]]
  $region77: #{tpu_custom_call.1} parent=0
    _
  %s9 = ssub.s32 1, %s7
  %s10 = scalar_select 0, %s9, %s7
  $region1: #{tpu_custom_call.1} parent=0
    #allocation2 [shape = 'u8[2048]{0}', space=smem, size = 0x800, scoped, tag = 'input window, operand 0, single buffered']
    #allocation3 [shape = 's32[2]{0}', space=sflag, size = 0x8, scoped, tag = 'scoped memory for tpu_custom_call.1']
    #allocation4 [shape = 's32[2]{0}', space=sflag, size = 0x8, scoped, tag = 'scoped memory for tpu_custom_call.1']
    #allocation5 [shape = 's32[2]{0}', space=sflag, size = 0x8, scoped, tag = 'scoped memory for tpu_custom_call.1']
    #allocation6 [shape = 'u8[512]{0}', space=smem, size = 0x200, scoped, tag = 'input window, operand 1, single buffered']
    #allocation7 [shape = 's32[1]{0}', space=sflag, size = 0x4, scoped, tag = 'scoped memory for tpu_custom_call.1']
    #allocation8 [shape = 'u8[512]{0}', space=smem, size = 0x200, scoped, tag = 'input window, operand 2, single buffered']
    #allocation9 [shape = 'u8[65536]{0}', space=vmem, size = 0x10000, scoped, tag = 'input window, operand 3']
    #allocation10 [shape = 'u8[16384]{0}', space=vmem, size = 0x4000, scoped, tag = 'input window, operand 5, single buffered']
    #allocation11 [shape = 's32[1]{0}', space=sflag, size = 0x4, scoped, tag = 'scoped memory for tpu_custom_call.1']
    #allocation12 [shape = 'u8[786432]{0}', space=vmem, size = 0xc0000, scoped, tag = 'output window, operand 0']
    %11 = vsyncpa [#allocation5], 0
    %12 = vsyncpa [#allocation7], 0
    %13 = vsyncpa [#allocation3], 0
    %s14 = scalar_lea.sflag [#allocation3], 1
    %15 = vsyncpa %s14, 0
    %16 = vsyncpa [#allocation11], 0
    %17 = vsyncpa [#allocation4], 0
    %s18 = scalar_lea.sflag [#allocation4], 1
    %19 = vsyncpa %s18, 0
    loop: start=0, step=1, limit=6
    $region2: #{tpu_custom_call.1} parent=1 // loop_pre_header
      _
    $region3: #{tpu_custom_call.1} parent=1 // loop_header
      %s21 = sphi 0, %s25
      %p22 = scmp.ge.s32.totalorder %s21, 6
      %s28 = sphi 0, %s40
      %s29 = sphi 0, %s36
      %s30 = sphi 0, %s28
      %s31 = sphi 0, %s29
      %s32 = sphi 0, %s30
      %s33 = sphi 0, %s31
      %s41 = sphi 0, %s41
      %s43 = sphi 0, %s41
      %s44 = sphi 0, %s43
      %s58 = sphi 0, %s44
      %s62 = sphi 0, %s62
      %s64 = sphi 0, %s62
      %s65 = sphi 0, %s64
      %s79 = sphi 0, %s65
      %s83 = sphi 0, %s83
      %s85 = sphi 0, %s83
      %s86 = sphi 0, %s85
      %s100 = sphi 0, %s86
      %s106 = sphi 0, %s108
      %s109 = sphi 0, %s106
      %s110 = sphi 0, %s109
      %s126 = sphi 0, %s110
      %s132 = sphi 0, %s134
      %s135 = sphi 0, %s132
      %s136 = sphi 0, %s135
      %s152 = sphi 0, %s136
      %s156 = sphi 0, %s156
      %s158 = sphi 0, %s156
      %s159 = sphi 0, %s158
      %s173 = sphi 0, %s159
      %s181 = sphi 0, %s183
      %s184 = sphi 0, %s181
      %s185 = sphi 0, %s184
      %s201 = sphi 0, %s185
    $region4: #{tpu_custom_call.1} parent=1 // loop_header_branch
      %24 = sbr.rel (%p22) target = $region8
    $region5: #{tpu_custom_call.1} parent=1 // loop_body
      %s26 = ssub.s32 %s21, 1
      %s27 = ssub.s32 %s21, 2
      %s34 = sadd.s32 1, %s29
      %p35 = scmp.ge.s32.totalorder %s34, 2
      %s36 = scalar_select %p35, 0, %s34
      %s37 = sadd.s32 1, %s28
      %s38 = scalar_select %p35, %s37, %s28
      %p39 = scmp.ge.s32.totalorder %s38, 2
      %s40 = scalar_select %p39, 0, %s38
      %s42 = sadd.s32 %s41, 1
      %p45 = scmp.eq.s32.totalorder %s21, 3
      %p46 = scmp.ne.s32.totalorder %s41, %s43
      %p47 = scmp.eq.s32.totalorder %s21, 0
      %p48 = por %p46, %p47
      %p49 = scmp.ne.s32.totalorder %s41, %s43
      %p50 = scmp.eq.s32.totalorder %s26, 3
      %p51 = por %p49, %p50
      %p52 = scmp.ne.s32.totalorder %s43, %s44
      %p53 = scmp.eq.s32.totalorder %s26, 0
      %p54 = por %p52, %p53
      %p55 = scmp.ne.s32.totalorder %s43, %s44
      %p56 = scmp.eq.s32.totalorder %s27, 3
      %p57 = por %p55, %p56
      %p59 = scmp.ne.s32.totalorder %s44, %s58
      %p60 = scmp.eq.s32.totalorder %s27, 0
      %p61 = por %p59, %p60
      %s63 = sadd.s32 %s62, 1
      %p66 = scmp.eq.s32.totalorder %s21, 3
      %p67 = scmp.ne.s32.totalorder %s62, %s64
      %p68 = scmp.eq.s32.totalorder %s21, 0
      %p69 = por %p67, %p68
      %p70 = scmp.ne.s32.totalorder %s62, %s64
      %p71 = scmp.eq.s32.totalorder %s26, 3
      %p72 = por %p70, %p71
      %p73 = scmp.ne.s32.totalorder %s64, %s65
      %p74 = scmp.eq.s32.totalorder %s26, 0
      %p75 = por %p73, %p74
      %p76 = scmp.ne.s32.totalorder %s64, %s65
      %p77 = scmp.eq.s32.totalorder %s27, 3
      %p78 = por %p76, %p77
      %p80 = scmp.ne.s32.totalorder %s65, %s79
      %p81 = scmp.eq.s32.totalorder %s27, 0
      %p82 = por %p80, %p81
      %s84 = sadd.s32 %s83, 1
      %p87 = scmp.eq.s32.totalorder %s21, 3
      %p88 = scmp.ne.s32.totalorder %s83, %s85
      %p89 = scmp.eq.s32.totalorder %s21, 0
      %p90 = por %p88, %p89
      %p91 = scmp.ne.s32.totalorder %s83, %s85
      %p92 = scmp.eq.s32.totalorder %s26, 3
      %p93 = por %p91, %p92
      %p94 = scmp.ne.s32.totalorder %s85, %s86
      %p95 = scmp.eq.s32.totalorder %s26, 0
      %p96 = por %p94, %p95
      %p97 = scmp.ne.s32.totalorder %s85, %s86
      %p98 = scmp.eq.s32.totalorder %s27, 3
      %p99 = por %p97, %p98
      %p101 = scmp.ne.s32.totalorder %s86, %s100
      %p102 = scmp.eq.s32.totalorder %s27, 0
      %p103 = por %p101, %p102
      %s104 = ssub.s32 %s28, %s40
      %p105 = scmp.eq.s32.totalorder %s104, 0
      %s107 = sadd.s32 %s106, 1
      %s108 = scalar_select %p105, %s106, %s107
      %p111 = pneg %p105
      %p112 = scmp.eq.s32.totalorder %s21, 3
      %p113 = por %p111, %p112
      %p114 = scmp.ne.s32.totalorder %s106, %s109
      %p115 = scmp.eq.s32.totalorder %s21, 0
      %p116 = por %p114, %p115
      %p117 = scmp.ne.s32.totalorder %s106, %s109
      %p118 = scmp.eq.s32.totalorder %s26, 3
      %p119 = por %p117, %p118
      %p120 = scmp.ne.s32.totalorder %s109, %s110
      %p121 = scmp.eq.s32.totalorder %s26, 0
      %p122 = por %p120, %p121
      %p123 = scmp.ne.s32.totalorder %s109, %s110
      %p124 = scmp.eq.s32.totalorder %s27, 3
      %p125 = por %p123, %p124
      %p127 = scmp.ne.s32.totalorder %s110, %s126
      %p128 = scmp.eq.s32.totalorder %s27, 0
      %p129 = por %p127, %p128
      %s130 = ssub.s32 %s29, %s36
      %p131 = scmp.eq.s32.totalorder %s130, 0
      %s133 = sadd.s32 %s132, 1
      %s134 = scalar_select %p131, %s132, %s133
      %p137 = pneg %p131
      %p138 = scmp.eq.s32.totalorder %s21, 3
      %p139 = por %p137, %p138
      %p140 = scmp.ne.s32.totalorder %s132, %s135
      %p141 = scmp.eq.s32.totalorder %s21, 0
      %p142 = por %p140, %p141
      %p143 = scmp.ne.s32.totalorder %s132, %s135
      %p144 = scmp.eq.s32.totalorder %s26, 3
      %p145 = por %p143, %p144
      %p146 = scmp.ne.s32.totalorder %s135, %s136
      %p147 = scmp.eq.s32.totalorder %s26, 0
      %p148 = por %p146, %p147
      %p149 = scmp.ne.s32.totalorder %s135, %s136
      %p150 = scmp.eq.s32.totalorder %s27, 3
      %p151 = por %p149, %p150
      %p153 = scmp.ne.s32.totalorder %s136, %s152
      %p154 = scmp.eq.s32.totalorder %s27, 0
      %p155 = por %p153, %p154
      %s157 = sadd.s32 %s156, 1
      %p160 = scmp.eq.s32.totalorder %s21, 3
      %p161 = scmp.ne.s32.totalorder %s156, %s158
      %p162 = scmp.eq.s32.totalorder %s21, 0
      %p163 = por %p161, %p162
      %p164 = scmp.ne.s32.totalorder %s156, %s158
      %p165 = scmp.eq.s32.totalorder %s26, 3
      %p166 = por %p164, %p165
      %p167 = scmp.ne.s32.totalorder %s158, %s159
      %p168 = scmp.eq.s32.totalorder %s26, 0
      %p169 = por %p167, %p168
      %p170 = scmp.ne.s32.totalorder %s158, %s159
      %p171 = scmp.eq.s32.totalorder %s27, 3
      %p172 = por %p170, %p171
      %p174 = scmp.ne.s32.totalorder %s159, %s173
      %p175 = scmp.eq.s32.totalorder %s27, 0
      %p176 = por %p174, %p175
      %s177 = ssub.s32 %s28, %s40
      %s178 = ssub.s32 %s29, %s36
      %s179 = sor.u32 %s177, %s178
      %p180 = scmp.eq.s32.totalorder %s179, 0
      %s182 = sadd.s32 %s181, 1
      %s183 = scalar_select %p180, %s181, %s182
      %p186 = pneg %p180
      %p187 = scmp.eq.s32.totalorder %s21, 3
      %p188 = por %p186, %p187
      %p189 = scmp.ne.s32.totalorder %s181, %s184
      %p190 = scmp.eq.s32.totalorder %s21, 0
      %p191 = por %p189, %p190
      %p192 = scmp.ne.s32.totalorder %s181, %s184
      %p193 = scmp.eq.s32.totalorder %s26, 3
      %p194 = por %p192, %p193
      %p195 = scmp.ne.s32.totalorder %s184, %s185
      %p196 = scmp.eq.s32.totalorder %s26, 0
      %p197 = por %p195, %p196
      %p198 = scmp.ne.s32.totalorder %s184, %s185
      %p199 = scmp.eq.s32.totalorder %s27, 3
      %p200 = por %p198, %p199
      %p202 = scmp.ne.s32.totalorder %s185, %s201
      %p203 = scmp.eq.s32.totalorder %s27, 0
      %p204 = por %p202, %p203
      %p205 = scmp.le.s32.totalorder 1, %s21
      %p206 = scmp.lt.s32.totalorder %s21, 5
      %p207 = pnand %p205, %p206
      %p208 = pneg %p207
      // Predicated region
      $region9: #{tpu_custom_call.1} parent=5 // pred_check
        _
      $region10: #{tpu_custom_call.1} parent=5 // pred_check_branch
        %210 = sbr.rel (%p207) target = $region12
      $region11: #{tpu_custom_call.1} parent=5 // pred_region
        %s211 = ssub.s32 %s21, 1
        // Predicated region
        $region13: #{tpu_custom_call.1} parent=11 // pred_check
          %p212 = pneg %p54
        $region14: #{tpu_custom_call.1} parent=11 // pred_check_branch
          %214 = sbr.rel (%p212) target = $region16
        $region15: #{tpu_custom_call.1} parent=11 // pred_region
          %s216 = ssub.s32 64, 64
          %217 = vsyncadd [#allocation5], %s216
          %220 = dma.hbm_to_smem %s0, 64, [#allocation2], [#allocation5]
        $region16: #{tpu_custom_call.1} parent=11 // pred_fallthru
          _
        // Predicated region
        $region17: #{tpu_custom_call.1} parent=11 // pred_check
          %p221 = pneg %p75
        $region18: #{tpu_custom_call.1} parent=11 // pred_check_branch
          %223 = sbr.rel (%p221) target = $region20
        $region19: #{tpu_custom_call.1} parent=11 // pred_region
          %s225 = ssub.s32 16, 16
          %226 = vsyncadd [#allocation7], %s225
          %229 = dma.hbm_to_smem %s1, 16, [#allocation6], [#allocation7]
        $region20: #{tpu_custom_call.1} parent=11 // pred_fallthru
          _
        // Predicated region
        $region21: #{tpu_custom_call.1} parent=11 // pred_check
          %p230 = pneg %p96
        $region22: #{tpu_custom_call.1} parent=11 // pred_check_branch
          %232 = sbr.rel (%p230) target = $region24
        $region23: #{tpu_custom_call.1} parent=11 // pred_region
          %s234 = ssub.s32 16, 16
          %235 = vsyncadd [#allocation7], %s234
          %238 = dma.hbm_to_smem %s2, 16, [#allocation8], [#allocation7]
        $region24: #{tpu_custom_call.1} parent=11 // pred_fallthru
          _
        // Predicated region
        $region25: #{tpu_custom_call.1} parent=11 // pred_check
          %p239 = pneg %p169
        $region26: #{tpu_custom_call.1} parent=11 // pred_check_branch
          %241 = sbr.rel (%p239) target = $region28
        $region27: #{tpu_custom_call.1} parent=11 // pred_region
          %s243 = ssub.s32 512, 512
          %244 = vsyncadd [#allocation11], %s243
          %s245 = sshll.u32 [#allocation10], 4
          %s246 = int_to_ptr.vmem [resolvable:$true] %s245
          %251 = dma.hbm_to_vmem [thread:$0]  %s5, 512, %s246, [#allocation11], 256, 256, 16
        $region28: #{tpu_custom_call.1} parent=11 // pred_fallthru
          _
      $region12: #{tpu_custom_call.1} parent=5 // pred_fallthru
        _
      %p252 = scmp.lt.s32.totalorder %s21, 4
      // Predicated region
      $region29: #{tpu_custom_call.1} parent=5 // pred_check
        %p253 = pneg %p252
      $region30: #{tpu_custom_call.1} parent=5 // pred_check_branch
        %255 = sbr.rel (%p253) target = $region32
      $region31: #{tpu_custom_call.1} parent=5 // pred_region
        // Predicated region
        $region33: #{tpu_custom_call.1} parent=31 // pred_check
          %p256 = pneg %p116
        $region34: #{tpu_custom_call.1} parent=31 // pred_check_branch
          %258 = sbr.rel (%p256) target = $region36
        $region35: #{tpu_custom_call.1} parent=31 // pred_region
          %s259 = sand.u32 %s106, 1
          %s260 = scalar_lea.sflag [#allocation3], %s259
          %s261 = sand.u32 %s106, 1
          %s262 = smul.addr %s261, 64
          %s263 = scalar_lea.vmem [#allocation9], %s262
          %s265 = ssub.s32 1024, 1024
          %266 = vsyncadd %s260, %s265
          %s267 = smul.addr %s28, 8
          %s268 = smul.addr %s267, 128
          %s269 = scalar_lea.hbm %s3, %s268
          %s270 = sshll.u32 %s263, 4
          %s271 = int_to_ptr.vmem [resolvable:$true] %s270
          %276 = dma.hbm_to_vmem [thread:$0]  %s269, 1024, %s271, %s260, 128, 128, 8
        $region36: #{tpu_custom_call.1} parent=31 // pred_fallthru
          _
        // Predicated region
        $region37: #{tpu_custom_call.1} parent=31 // pred_check
          %p277 = pneg %p142
        $region38: #{tpu_custom_call.1} parent=31 // pred_check_branch
          %279 = sbr.rel (%p277) target = $region40
        $region39: #{tpu_custom_call.1} parent=31 // pred_region
          %s280 = smul.u32 16, %s29
          %p281 = scmp.lt.s32.totalorder %s280, 31
          %s282 = scalar_select %p281, %s280, 31
          %s283 = smul.addr %s282, 8
          %s284 = scalar_lea.vmem %s4, %s283
          %s285 = smul.u32 16, %s29
        $region40: #{tpu_custom_call.1} parent=31 // pred_fallthru
          _
      $region32: #{tpu_custom_call.1} parent=5 // pred_fallthru
        _
      %p286 = scmp.le.s32.totalorder 1, %s21
      %p287 = scmp.lt.s32.totalorder %s21, 5
      %p288 = pnand %p286, %p287
      %p289 = pneg %p288
      // Predicated region
      $region41: #{tpu_custom_call.1} parent=5 // pred_check
        _
      $region42: #{tpu_custom_call.1} parent=5 // pred_check_branch
        %291 = sbr.rel (%p288) target = $region44
      $region43: #{tpu_custom_call.1} parent=5 // pred_region
        %s292 = ssub.s32 %s21, 1
        // Predicated region
        $region45: #{tpu_custom_call.1} parent=43 // pred_check
          %p293 = pneg %p54
        $region46: #{tpu_custom_call.1} parent=43 // pred_check_branch
          %295 = sbr.rel (%p293) target = $region48
        $region47: #{tpu_custom_call.1} parent=43 // pred_region
          %296 = dma.done [#allocation5], 64
        $region48: #{tpu_custom_call.1} parent=43 // pred_fallthru
          _
        // Predicated region
        $region49: #{tpu_custom_call.1} parent=43 // pred_check
          %p297 = pneg %p75
        $region50: #{tpu_custom_call.1} parent=43 // pred_check_branch
          %299 = sbr.rel (%p297) target = $region52
        $region51: #{tpu_custom_call.1} parent=43 // pred_region
          %300 = dma.done [#allocation7], 16
        $region52: #{tpu_custom_call.1} parent=43 // pred_fallthru
          _
        // Predicated region
        $region53: #{tpu_custom_call.1} parent=43 // pred_check
          %p301 = pneg %p96
        $region54: #{tpu_custom_call.1} parent=43 // pred_check_branch
          %303 = sbr.rel (%p301) target = $region56
        $region55: #{tpu_custom_call.1} parent=43 // pred_region
          %304 = dma.done [#allocation7], 16
        $region56: #{tpu_custom_call.1} parent=43 // pred_fallthru
          _
        %s305 = sand.u32 %s109, 1
        %s306 = scalar_lea.sflag [#allocation3], %s305
        %s307 = sand.u32 %s109, 1
        %s308 = smul.addr %s307, 64
        %s309 = scalar_lea.vmem [#allocation9], %s308
        // Predicated region
        $region57: #{tpu_custom_call.1} parent=43 // pred_check
          %p310 = pneg %p122
        $region58: #{tpu_custom_call.1} parent=43 // pred_check_branch
          %312 = sbr.rel (%p310) target = $region60
        $region59: #{tpu_custom_call.1} parent=43 // pred_region
          %313 = dma.done %s306, 1024
        $region60: #{tpu_custom_call.1} parent=43 // pred_fallthru
          _
        // Predicated region
        $region61: #{tpu_custom_call.1} parent=43 // pred_check
          %p314 = pneg %p169
        $region62: #{tpu_custom_call.1} parent=43 // pred_check_branch
          %316 = sbr.rel (%p314) target = $region64
        $region63: #{tpu_custom_call.1} parent=43 // pred_region
          %317 = dma.done [#allocation11], 512
        $region64: #{tpu_custom_call.1} parent=43 // pred_fallthru
          _
        %318 = sfence
        %p319 = pneg %p54
        %p320 = pneg %p51
        %p321 = pneg %p75
        %p322 = pneg %p72
        %p323 = pneg %p96
        %p324 = pneg %p93
        %s325 = sand.u32 %s109, 1
        %s326 = scalar_lea.sflag [#allocation3], %s325
        %s327 = sand.u32 %s109, 1
        %s328 = smul.addr %s327, 64
        %s329 = scalar_lea.vmem [#allocation9], %s328
        %p330 = pneg %p122
        %p331 = pneg %p119
        %s332 = smul.u32 16, %s31
        %p333 = scmp.lt.s32.totalorder %s332, 31
        %s334 = scalar_select %p333, %s332, 31
        %s335 = smul.addr %s334, 8
        %s336 = scalar_lea.vmem %s4, %s335
        %p337 = pneg %p148
        %p338 = pneg %p145
        %p339 = pneg %p169
        %p340 = pneg %p166
        %p341 = pneg %p197
        %p342 = pneg %p194
        %s343 = sand.u32 %s184, 1
        %s344 = scalar_lea.sflag [#allocation4], %s343
        %s345 = sand.u32 %s184, 1
        %s346 = smul.addr %s345, 768
        %s347 = scalar_lea.vmem [#allocation12], %s346
        %s348 = smul.u32 16, %s31
        %p349 = scmp.lt.s32.totalorder %s348, 31
        %s350 = scalar_select %p349, %s348, 31
        %s351 = smul.addr %s350, 8
        %s352 = scalar_lea.vmem %s4, %s351
        %s353 = smul.u32 16, %s31
        %s354 = smul.u32 16, %s31
        %v355 = vld [vmem:[%s309] sm:$0xff]
        %v356 = vld [vmem:[%s309 + $0x8] sm:$0xff]
        %v357 = vld [vmem:[%s309 + $0x10] sm:$0xff]
        %v358 = vld [vmem:[%s309 + $0x18] sm:$0xff]
        %v359 = vld [vmem:[%s309 + $0x20] sm:$0xff]
        %v360 = vld [vmem:[%s309 + $0x28] sm:$0xff]
        %v361 = vld [vmem:[%s309 + $0x30] sm:$0xff]
        %v362 = vld [vmem:[%s309 + $0x38] sm:$0xff]
        %v363 = vand.u32 2147483647, %v355
        %v364 = vand.u32 2147483647, %v356
        %v365 = vsub.f32 0.0, %v363
        %v366 = vsub.f32 0.0, %v364
        %v367 = vmul.f32 %v365, 1.442695
        %v368 = vpow.pop %v367
        %v369 = vmul.f32 %v366, 1.442695
        %v370 = vpow.pop %v369
        %vm371 = vcmp.ge.f32.partialorder %v355, 0.0
        %vm372 = vcmp.ge.f32.partialorder %v356, 0.0
        %v373 = vadd.f32 %v368, 1.0
        %v374 = vadd.f32 %v370, 1.0
        %v375 = vrcp.pop %v373
        %v376 = vmul.f32 1.0, %v375
        %v377 = vrcp.pop %v374
        %v378 = vmul.f32 1.0, %v377
        %v379 = vmul.f32 %v368, %v375
        %v380 = vmul.f32 %v370, %v377
        %v381 = vsel %vm371, %v376, %v379
        %v382 = vsel %vm372, %v378, %v380
        %s383 = sld [smem:[#allocation8]]
        %v384 = vstv %s383
        %v385 = vsub.f32 %v381, %v384
        %v386 = vsub.f32 %v382, %v384
        %v387 = vand.u32 2147483647, %v385
        %v388 = vand.u32 2147483647, %v386
        %v389 = vand.u32 2147483647, %v357
        %v390 = vand.u32 2147483647, %v358
        %v391 = vsub.f32 0.0, %v389
        %v392 = vsub.f32 0.0, %v390
        %v393 = vmul.f32 %v391, 1.442695
        %v394 = vpow.pop %v393
        %v395 = vmul.f32 %v392, 1.442695
        %v396 = vpow.pop %v395
        %vm397 = vcmp.ge.f32.partialorder %v357, 0.0
        %vm398 = vcmp.ge.f32.partialorder %v358, 0.0
        %v399 = vadd.f32 %v394, 1.0
        %v400 = vadd.f32 %v396, 1.0
        %v401 = vrcp.pop %v399
        %v402 = vmul.f32 1.0, %v401
        %v403 = vrcp.pop %v400
        %v404 = vmul.f32 1.0, %v403
        %v405 = vmul.f32 %v394, %v401
        %v406 = vmul.f32 %v396, %v403
        %v407 = vsel %vm397, %v402, %v405
        %v408 = vsel %vm398, %v404, %v406
        %s409 = sld [smem:[#allocation8 + $0x1]]
        %v410 = vstv %s409
        %v411 = vsub.f32 %v407, %v410
        %v412 = vsub.f32 %v408, %v410
        %v413 = vand.u32 2147483647, %v411
        %v414 = vand.u32 2147483647, %v412
        %v415 = vand.u32 2147483647, %v359
        %v416 = vand.u32 2147483647, %v360
        %v417 = vsub.f32 0.0, %v415
        %v418 = vsub.f32 0.0, %v416
        %v419 = vmul.f32 %v417, 1.442695
        %v420 = vpow.pop %v419
        %v421 = vmul.f32 %v418, 1.442695
        %v422 = vpow.pop %v421
        %vm423 = vcmp.ge.f32.partialorder %v359, 0.0
        %vm424 = vcmp.ge.f32.partialorder %v360, 0.0
        %v425 = vadd.f32 %v420, 1.0
        %v426 = vadd.f32 %v422, 1.0
        %v427 = vrcp.pop %v425
        %v428 = vmul.f32 1.0, %v427
        %v429 = vrcp.pop %v426
        %v430 = vmul.f32 1.0, %v429
        %v431 = vmul.f32 %v420, %v427
        %v432 = vmul.f32 %v422, %v429
        %v433 = vsel %vm423, %v428, %v431
        %v434 = vsel %vm424, %v430, %v432
        %s435 = sld [smem:[#allocation8 + $0x2]]
        %v436 = vstv %s435
        %v437 = vsub.f32 %v433, %v436
        %v438 = vsub.f32 %v434, %v436
        %v439 = vand.u32 2147483647, %v437
        %v440 = vand.u32 2147483647, %v438
        %v441 = vand.u32 2147483647, %v361
        %v442 = vand.u32 2147483647, %v362
        %v443 = vsub.f32 0.0, %v441
        %v444 = vsub.f32 0.0, %v442
        %v445 = vmul.f32 %v443, 1.442695
        %v446 = vpow.pop %v445
        %v447 = vmul.f32 %v444, 1.442695
        %v448 = vpow.pop %v447
        %vm449 = vcmp.ge.f32.partialorder %v361, 0.0
        %vm450 = vcmp.ge.f32.partialorder %v362, 0.0
        %v451 = vadd.f32 %v446, 1.0
        %v452 = vadd.f32 %v448, 1.0
        %v453 = vrcp.pop %v451
        %v454 = vmul.f32 1.0, %v453
        %v455 = vrcp.pop %v452
        %v456 = vmul.f32 1.0, %v455
        %v457 = vmul.f32 %v446, %v453
        %v458 = vmul.f32 %v448, %v455
        %v459 = vsel %vm449, %v454, %v457
        %v460 = vsel %vm450, %v456, %v458
        %s461 = sld [smem:[#allocation8 + $0x3]]
        %v462 = vstv %s461
        %v463 = vsub.f32 %v459, %v462
        %v464 = vsub.f32 %v460, %v462
        %v465 = vand.u32 2147483647, %v463
        %v466 = vand.u32 2147483647, %v464
        %s467 = sld [smem:[#allocation6]]
        %v468 = vstv %s467
        %s469 = sld [smem:[#allocation2]]
        %v470 = vstv %s469
        %v471 = vmul.f32 %v470, %v387
        %v472 = vmul.f32 %v470, %v388
        %v473 = vadd.f32 %v468, %v471
        %v474 = vadd.f32 %v468, %v472
        %s475 = sld [smem:[#allocation2 + $0x1]]
        %v476 = vstv %s475
        %v477 = vmul.f32 %v476, %v413
        %v478 = vmul.f32 %v476, %v414
        %v479 = vadd.f32 %v473, %v477
        %v480 = vadd.f32 %v474, %v478
        %s481 = sld [smem:[#allocation2 + $0x2]]
        %v482 = vstv %s481
        %v483 = vmul.f32 %v482, %v439
        %v484 = vmul.f32 %v482, %v440
        %v485 = vadd.f32 %v479, %v483
        %v486 = vadd.f32 %v480, %v484
        %s487 = sld [smem:[#allocation2 + $0x3]]
        %v488 = vstv %s487
        %v489 = vmul.f32 %v488, %v465
        %v490 = vmul.f32 %v488, %v466
        %v491 = vadd.f32 %v485, %v489
        %v492 = vadd.f32 %v486, %v490
        %s493 = sld [smem:[#allocation6 + $0x1]]
        %v494 = vstv %s493
        %s495 = sld [smem:[#allocation2 + $0x80]]
        %v496 = vstv %s495
        %v497 = vmul.f32 %v496, %v387
        %v498 = vmul.f32 %v496, %v388
        %v499 = vadd.f32 %v494, %v497
        %v500 = vadd.f32 %v494, %v498
        %s501 = sld [smem:[#allocation2 + $0x81]]
        %v502 = vstv %s501
        %v503 = vmul.f32 %v502, %v413
        %v504 = vmul.f32 %v502, %v414
        %v505 = vadd.f32 %v499, %v503
        %v506 = vadd.f32 %v500, %v504
        %s507 = sld [smem:[#allocation2 + $0x82]]
        %v508 = vstv %s507
        %v509 = vmul.f32 %v508, %v439
        %v510 = vmul.f32 %v508, %v440
        %v511 = vadd.f32 %v505, %v509
        %v512 = vadd.f32 %v506, %v510
        %s513 = sld [smem:[#allocation2 + $0x83]]
        %v514 = vstv %s513
        %v515 = vmul.f32 %v514, %v465
        %v516 = vmul.f32 %v514, %v466
        %v517 = vadd.f32 %v511, %v515
        %v518 = vadd.f32 %v512, %v516
        %s519 = sld [smem:[#allocation6 + $0x2]]
        %v520 = vstv %s519
        %s521 = sld [smem:[#allocation2 + $0x100]]
        %v522 = vstv %s521
        %v523 = vmul.f32 %v522, %v387
        %v524 = vmul.f32 %v522, %v388
        %v525 = vadd.f32 %v520, %v523
        %v526 = vadd.f32 %v520, %v524
        %s527 = sld [smem:[#allocation2 + $0x101]]
        %v528 = vstv %s527
        %v529 = vmul.f32 %v528, %v413
        %v530 = vmul.f32 %v528, %v414
        %v531 = vadd.f32 %v525, %v529
        %v532 = vadd.f32 %v526, %v530
        %s533 = sld [smem:[#allocation2 + $0x102]]
        %v534 = vstv %s533
        %v535 = vmul.f32 %v534, %v439
        %v536 = vmul.f32 %v534, %v440
        %v537 = vadd.f32 %v531, %v535
        %v538 = vadd.f32 %v532, %v536
        %s539 = sld [smem:[#allocation2 + $0x103]]
        %v540 = vstv %s539
        %v541 = vmul.f32 %v540, %v465
        %v542 = vmul.f32 %v540, %v466
        %v543 = vadd.f32 %v537, %v541
        %v544 = vadd.f32 %v538, %v542
        %v545 = vld [vmem:[#allocation10] sm:$0xff]
        %v546 = vld [vmem:[#allocation10 + $0x8] sm:$0xff]
        %v547 = vld [vmem:[#allocation10 + $0x10] sm:$0xff]
        %v548 = vld [vmem:[#allocation10 + $0x18] sm:$0xff]
        %vm549 = vcmask 130048
        %v551 = vsel %vm549, %v491, 0
        %v554 = vsel %vm549, %v492, 0
        %v557 = vsel %vm549, %v517, 0
        %v560 = vsel %vm549, %v518, 0
        %v563 = vsel %vm549, %v543, 0
        %v566 = vsel %vm549, %v544, 0
        %568 = vmatprep.subr.mxu0 0.0
        %569 = vmatpush1.msra.mxu0 0.0
        %570 = vmatprep.subr.mxu0 0.0
        %571 = vmatpush1.msra.mxu0 0.0
        %572 = vmatprep.subr.mxu0 0.0
        %573 = vmatpush1.msra.mxu0 0.0
        %574 = vmatprep.subr.mxu0 0.0
        %575 = vmatpush1.msra.mxu0 0.0
        %576 = vmatprep.subr.mxu0 0.0
        %577 = vmatpush1.msra.mxu0 0.0
        %578 = vmatprep.subr.mxu0 0.0
        %579 = vmatpush1.msra.mxu0 0.0
        %580 = vmatprep.subr.mxu0 0.0
        %581 = vmatpush1.msra.mxu0 0.0
        %582 = vmatprep.subr.mxu0 0.0
        %583 = vmatpush1.msra.mxu0 0.0
        %584 = vmatprep.subr.mxu0 0.0
        %585 = vmatpush1.msra.mxu0 0.0
        %586 = vmatprep.subr.mxu0 0.0
        %587 = vmatpush1.msra.mxu0 0.0
        %588 = vmatprep.subr.mxu0 0.0
        %589 = vmatpush1.msra.mxu0 0.0
        %590 = vmatprep.subr.mxu0 0.0
        %591 = vmatpush1.msra.mxu0 0.0
        %592 = vmatprep.subr.mxu0 0.0
        %593 = vmatpush1.msra.mxu0 0.0
        %594 = vmatprep.subr.mxu0 0.0
        %595 = vmatpush1.msra.mxu0 0.0
        %596 = vmatprep.subr.mxu0 %v548
        %597 = vmatpush1.msra.mxu0 %v547
        %598 = vmatprep.subr.mxu0 %v546
        %599 = vmatpush1.msra.mxu0 %v545
        %600 = vmatprep.subr.mxu0 0.0
        %601 = vmatpush2.msra.mxu0 0.0
        %602 = vmatprep.subr.mxu0 0.0
        %603 = vmatpush2.msra.mxu0 0.0
        %604 = vmatprep.subr.mxu0 0.0
        %605 = vmatpush2.msra.mxu0 0.0
        %606 = vmatprep.subr.mxu0 0.0
        %607 = vmatpush2.msra.mxu0 0.0
        %608 = vmatprep.subr.mxu0 0.0
        %609 = vmatpush2.msra.mxu0 0.0
        %610 = vmatprep.subr.mxu0 0.0
        %611 = vmatpush2.msra.mxu0 0.0
        %612 = vmatprep.subr.mxu0 0.0
        %613 = vmatpush2.msra.mxu0 0.0
        %614 = vmatprep.subr.mxu0 0.0
        %615 = vmatpush2.msra.mxu0 0.0
        %616 = vmatprep.subr.mxu0 0.0
        %617 = vmatpush2.msra.mxu0 0.0
        %618 = vmatprep.subr.mxu0 0.0
        %619 = vmatpush2.msra.mxu0 0.0
        %620 = vmatprep.subr.mxu0 0.0
        %621 = vmatpush2.msra.mxu0 0.0
        %622 = vmatprep.subr.mxu0 0.0
        %623 = vmatpush2.msra.mxu0 0.0
        %624 = vmatprep.subr.mxu0 0.0
        %625 = vmatpush2.msra.mxu0 0.0
        %626 = vmatprep.subr.mxu0 0.0
        %627 = vmatpush2.msra.mxu0 0.0
        %628 = vmatprep.subr.mxu0 0.0
        %629 = vmatpush2.msra.mxu0 0.0
        %630 = vmatprep.subr.mxu0 0.0
        %631 = vmatpush2.msra.mxu0 0.0
        %632 = vmatprep.mubr.f32.mxu0 0.0
        %633 = vmatmul.mubr.f32.gmra.mxu0 %v551
        %v634 = vpop.f32.mrf.mxu0
        %v635 = vadd.f32 0.0, %v634
        %v636 = vpop.f32.mrf.mxu0
        %v637 = vadd.f32 0.0, %v636
        %638 = vmatprep.mubr.f32.mxu0 0.0
        %639 = vmatmul.mubr.f32.gmra.mxu0 %v554
        %v640 = vpop.f32.mrf.mxu0
        %v641 = vadd.f32 0.0, %v640
        %v642 = vpop.f32.mrf.mxu0
        %v643 = vadd.f32 0.0, %v642
        %644 = vmatprep.mubr.f32.mxu0 0.0
        %645 = vmatmul.mubr.f32.gmra.mxu0 %v557
        %v646 = vpop.f32.mrf.mxu0
        %v647 = vadd.f32 0.0, %v646
        %v648 = vpop.f32.mrf.mxu0
        %v649 = vadd.f32 0.0, %v648
        %650 = vmatprep.mubr.f32.mxu0 0.0
        %651 = vmatmul.mubr.f32.gmra.mxu0 %v560
        %v652 = vpop.f32.mrf.mxu0
        %v653 = vadd.f32 0.0, %v652
        %v654 = vpop.f32.mrf.mxu0
        %v655 = vadd.f32 0.0, %v654
        %656 = vmatprep.mubr.f32.mxu0 0.0
        %657 = vmatmul.mubr.f32.gmra.mxu0 %v563
        %v658 = vpop.f32.mrf.mxu0
        %v659 = vadd.f32 0.0, %v658
        %v660 = vpop.f32.mrf.mxu0
        %v661 = vadd.f32 0.0, %v660
        %662 = vmatprep.mubr.f32.mxu0 0.0
        %663 = vmatmul.mubr.f32.gmra.mxu0 %v566
        %v664 = vpop.f32.mrf.mxu0
        %v665 = vadd.f32 0.0, %v664
        %v666 = vpop.f32.mrf.mxu0
        %v667 = vadd.f32 0.0, %v666
        %668 = vdwg.mxu0
        %v669 = vld [vmem:[%s352] sm:$0xff]
        %v670 = vld [vmem:[%s352 + $0x8] sm:$0xff]
        %v671 = vld [vmem:[%s352 + $0x10] sm:$0xff]
        %v672 = vld [vmem:[%s352 + $0x18] sm:$0xff]
        %v673 = vld [vmem:[%s352 + $0x20] sm:$0xff]
        %v674 = vld [vmem:[%s352 + $0x28] sm:$0xff]
        %v675 = vld [vmem:[%s352 + $0x30] sm:$0xff]
        %v676 = vld [vmem:[%s352 + $0x38] sm:$0xff]
        %v677 = vld [vmem:[%s352 + $0x40] sm:$0xff]
        %v678 = vld [vmem:[%s352 + $0x48] sm:$0xff]
        %v679 = vld [vmem:[%s352 + $0x50] sm:$0xff]
        %v680 = vld [vmem:[%s352 + $0x58] sm:$0xff]
        %v681 = vld [vmem:[%s352 + $0x60] sm:$0xff]
        %v682 = vld [vmem:[%s352 + $0x68] sm:$0xff]
        %v683 = vld [vmem:[%s352 + $0x70] sm:$0xff]
        %v684 = vld [vmem:[%s352 + $0x78] sm:$0xff]
        %v686 = vsel %vm549, %v669, 0
        %v689 = vsel %vm549, %v670, 0
        %v692 = vsel %vm549, %v671, 0
        %v695 = vsel %vm549, %v672, 0
        %v698 = vsel %vm549, %v673, 0
        %v701 = vsel %vm549, %v674, 0
        %v704 = vsel %vm549, %v675, 0
        %v707 = vsel %vm549, %v676, 0
        %v710 = vsel %vm549, %v677, 0
        %v713 = vsel %vm549, %v678, 0
        %v716 = vsel %vm549, %v679, 0
        %v719 = vsel %vm549, %v680, 0
        %v722 = vsel %vm549, %v681, 0
        %v725 = vsel %vm549, %v682, 0
        %v728 = vsel %vm549, %v683, 0
        %v731 = vsel %vm549, %v684, 0
        %733 = vmatprep.subr.mxu0 0.0
        %734 = vmatpush1.msra.mxu0 0.0
        %735 = vmatprep.subr.mxu0 0.0
        %736 = vmatpush1.msra.mxu0 0.0
        %737 = vmatprep.subr.mxu0 0.0
        %738 = vmatpush1.msra.mxu0 0.0
        %739 = vmatprep.subr.mxu0 0.0
        %740 = vmatpush1.msra.mxu0 0.0
        %741 = vmatprep.subr.mxu0 0.0
        %742 = vmatpush1.msra.mxu0 0.0
        %743 = vmatprep.subr.mxu0 0.0
        %744 = vmatpush1.msra.mxu0 0.0
        %745 = vmatprep.subr.mxu0 0.0
        %746 = vmatpush1.msra.mxu0 0.0
        %747 = vmatprep.subr.mxu0 0.0
        %748 = vmatpush1.msra.mxu0 0.0
        %749 = vmatprep.subr.mxu0 0.0
        %750 = vmatpush1.msra.mxu0 0.0
        %751 = vmatprep.subr.mxu0 0.0
        %752 = vmatpush1.msra.mxu0 0.0
        %753 = vmatprep.subr.mxu0 0.0
        %754 = vmatpush1.msra.mxu0 0.0
        %755 = vmatprep.subr.mxu0 0.0
        %756 = vmatpush1.msra.mxu0 0.0
        %757 = vmatprep.subr.mxu0 0.0
        %758 = vmatpush1.msra.mxu0 0.0
        %759 = vmatprep.subr.mxu0 0.0
        %760 = vmatpush1.msra.mxu0 0.0
        %761 = vmatprep.subr.mxu0 %v643
        %762 = vmatpush1.msra.mxu0 %v641
        %763 = vmatprep.subr.mxu0 %v637
        %764 = vmatpush1.msra.mxu0 %v635
        %765 = vmatprep.subr.mxu0 0.0
        %766 = vmatpush2.msra.mxu0 0.0
        %767 = vmatprep.subr.mxu0 0.0
        %768 = vmatpush2.msra.mxu0 0.0
        %769 = vmatprep.subr.mxu0 0.0
        %770 = vmatpush2.msra.mxu0 0.0
        %771 = vmatprep.subr.mxu0 0.0
        %772 = vmatpush2.msra.mxu0 0.0
        %773 = vmatprep.subr.mxu0 0.0
        %774 = vmatpush2.msra.mxu0 0.0
        %775 = vmatprep.subr.mxu0 0.0
        %776 = vmatpush2.msra.mxu0 0.0
        %777 = vmatprep.subr.mxu0 0.0
        %778 = vmatpush2.msra.mxu0 0.0
        %779 = vmatprep.subr.mxu0 0.0
        %780 = vmatpush2.msra.mxu0 0.0
        %781 = vmatprep.subr.mxu0 0.0
        %782 = vmatpush2.msra.mxu0 0.0
        %783 = vmatprep.subr.mxu0 0.0
        %784 = vmatpush2.msra.mxu0 0.0
        %785 = vmatprep.subr.mxu0 0.0
        %786 = vmatpush2.msra.mxu0 0.0
        %787 = vmatprep.subr.mxu0 0.0
        %788 = vmatpush2.msra.mxu0 0.0
        %789 = vmatprep.subr.mxu0 0.0
        %790 = vmatpush2.msra.mxu0 0.0
        %791 = vmatprep.subr.mxu0 0.0
        %792 = vmatpush2.msra.mxu0 0.0
        %793 = vmatprep.subr.mxu0 0.0
        %794 = vmatpush2.msra.mxu0 0.0
        %795 = vmatprep.subr.mxu0 0.0
        %796 = vmatpush2.msra.mxu0 0.0
        %797 = vmatprep.mubr.f32.mxu0 0.0
        %798 = vmatmul.mubr.f32.gmra.mxu0 %v686
        %v799 = vpop.f32.mrf.mxu0
        %v800 = vadd.f32 0.0, %v799
        %v801 = vpop.f32.mrf.mxu0
        %v802 = vadd.f32 0.0, %v801
        %803 = vmatprep.mubr.f32.mxu0 0.0
        %804 = vmatmul.mubr.f32.gmra.mxu0 %v689
        %v805 = vpop.f32.mrf.mxu0
        %v806 = vadd.f32 0.0, %v805
        %v807 = vpop.f32.mrf.mxu0
        %v808 = vadd.f32 0.0, %v807
        %809 = vmatprep.mubr.f32.mxu0 0.0
        %810 = vmatmul.mubr.f32.gmra.mxu0 %v692
        %v811 = vpop.f32.mrf.mxu0
        %v812 = vadd.f32 0.0, %v811
        %v813 = vpop.f32.mrf.mxu0
        %v814 = vadd.f32 0.0, %v813
        %815 = vmatprep.mubr.f32.mxu0 0.0
        %816 = vmatmul.mubr.f32.gmra.mxu0 %v695
        %v817 = vpop.f32.mrf.mxu0
        %v818 = vadd.f32 0.0, %v817
        %v819 = vpop.f32.mrf.mxu0
        %v820 = vadd.f32 0.0, %v819
        %821 = vmatprep.mubr.f32.mxu0 0.0
        %822 = vmatmul.mubr.f32.gmra.mxu0 %v698
        %v823 = vpop.f32.mrf.mxu0
        %v824 = vadd.f32 0.0, %v823
        %v825 = vpop.f32.mrf.mxu0
        %v826 = vadd.f32 0.0, %v825
        %827 = vmatprep.mubr.f32.mxu0 0.0
        %828 = vmatmul.mubr.f32.gmra.mxu0 %v701
        %v829 = vpop.f32.mrf.mxu0
        %v830 = vadd.f32 0.0, %v829
        %v831 = vpop.f32.mrf.mxu0
        %v832 = vadd.f32 0.0, %v831
        %833 = vmatprep.mubr.f32.mxu0 0.0
        %834 = vmatmul.mubr.f32.gmra.mxu0 %v704
        %v835 = vpop.f32.mrf.mxu0
        %v836 = vadd.f32 0.0, %v835
        %v837 = vpop.f32.mrf.mxu0
        %v838 = vadd.f32 0.0, %v837
        %839 = vmatprep.mubr.f32.mxu0 0.0
        %840 = vmatmul.mubr.f32.gmra.mxu0 %v707
        %v841 = vpop.f32.mrf.mxu0
        %v842 = vadd.f32 0.0, %v841
        %v843 = vpop.f32.mrf.mxu0
        %v844 = vadd.f32 0.0, %v843
        %845 = vmatprep.mubr.f32.mxu0 0.0
        %846 = vmatmul.mubr.f32.gmra.mxu0 %v710
        %v847 = vpop.f32.mrf.mxu0
        %v848 = vadd.f32 0.0, %v847
        %v849 = vpop.f32.mrf.mxu0
        %v850 = vadd.f32 0.0, %v849
        %851 = vmatprep.mubr.f32.mxu0 0.0
        %852 = vmatmul.mubr.f32.gmra.mxu0 %v713
        %v853 = vpop.f32.mrf.mxu0
        %v854 = vadd.f32 0.0, %v853
        %v855 = vpop.f32.mrf.mxu0
        %v856 = vadd.f32 0.0, %v855
        %857 = vmatprep.mubr.f32.mxu0 0.0
        %858 = vmatmul.mubr.f32.gmra.mxu0 %v716
        %v859 = vpop.f32.mrf.mxu0
        %v860 = vadd.f32 0.0, %v859
        %v861 = vpop.f32.mrf.mxu0
        %v862 = vadd.f32 0.0, %v861
        %863 = vmatprep.mubr.f32.mxu0 0.0
        %864 = vmatmul.mubr.f32.gmra.mxu0 %v719
        %v865 = vpop.f32.mrf.mxu0
        %v866 = vadd.f32 0.0, %v865
        %v867 = vpop.f32.mrf.mxu0
        %v868 = vadd.f32 0.0, %v867
        %869 = vmatprep.mubr.f32.mxu0 0.0
        %870 = vmatmul.mubr.f32.gmra.mxu0 %v722
        %v871 = vpop.f32.mrf.mxu0
        %v872 = vadd.f32 0.0, %v871
        %v873 = vpop.f32.mrf.mxu0
        %v874 = vadd.f32 0.0, %v873
        %875 = vmatprep.mubr.f32.mxu0 0.0
        %876 = vmatmul.mubr.f32.gmra.mxu0 %v725
        %v877 = vpop.f32.mrf.mxu0
        %v878 = vadd.f32 0.0, %v877
        %v879 = vpop.f32.mrf.mxu0
        %v880 = vadd.f32 0.0, %v879
        %881 = vmatprep.mubr.f32.mxu0 0.0
        %882 = vmatmul.mubr.f32.gmra.mxu0 %v728
        %v883 = vpop.f32.mrf.mxu0
        %v884 = vadd.f32 0.0, %v883
        %v885 = vpop.f32.mrf.mxu0
        %v886 = vadd.f32 0.0, %v885
        %887 = vmatprep.mubr.f32.mxu0 0.0
        %888 = vmatmul.mubr.f32.gmra.mxu0 %v731
        %v889 = vpop.f32.mrf.mxu0
        %v890 = vadd.f32 0.0, %v889
        %v891 = vpop.f32.mrf.mxu0
        %v892 = vadd.f32 0.0, %v891
        %893 = vdwg.mxu0
        %894 = vst [vmem:[%s347] sm:$0xff] %v800
        %895 = vst [vmem:[%s347 + $0x8] sm:$0xff] %v802
        %896 = vst [vmem:[%s347 + $0x10] sm:$0xff] %v806
        %897 = vst [vmem:[%s347 + $0x18] sm:$0xff] %v808
        %898 = vst [vmem:[%s347 + $0x20] sm:$0xff] %v812
        %899 = vst [vmem:[%s347 + $0x28] sm:$0xff] %v814
        %900 = vst [vmem:[%s347 + $0x30] sm:$0xff] %v818
        %901 = vst [vmem:[%s347 + $0x38] sm:$0xff] %v820
        %902 = vst [vmem:[%s347 + $0x40] sm:$0xff] %v824
        %903 = vst [vmem:[%s347 + $0x48] sm:$0xff] %v826
        %904 = vst [vmem:[%s347 + $0x50] sm:$0xff] %v830
        %905 = vst [vmem:[%s347 + $0x58] sm:$0xff] %v832
        %906 = vst [vmem:[%s347 + $0x60] sm:$0xff] %v836
        %907 = vst [vmem:[%s347 + $0x68] sm:$0xff] %v838
        %908 = vst [vmem:[%s347 + $0x70] sm:$0xff] %v842
        %909 = vst [vmem:[%s347 + $0x78] sm:$0xff] %v844
        %910 = vst [vmem:[%s347 + $0x80] sm:$0xff] %v848
        %911 = vst [vmem:[%s347 + $0x88] sm:$0xff] %v850
        %912 = vst [vmem:[%s347 + $0x90] sm:$0xff] %v854
        %913 = vst [vmem:[%s347 + $0x98] sm:$0xff] %v856
        %914 = vst [vmem:[%s347 + $0xa0] sm:$0xff] %v860
        %915 = vst [vmem:[%s347 + $0xa8] sm:$0xff] %v862
        %916 = vst [vmem:[%s347 + $0xb0] sm:$0xff] %v866
        %917 = vst [vmem:[%s347 + $0xb8] sm:$0xff] %v868
        %918 = vst [vmem:[%s347 + $0xc0] sm:$0xff] %v872
        %919 = vst [vmem:[%s347 + $0xc8] sm:$0xff] %v874
        %920 = vst [vmem:[%s347 + $0xd0] sm:$0xff] %v878
        %921 = vst [vmem:[%s347 + $0xd8] sm:$0xff] %v880
        %922 = vst [vmem:[%s347 + $0xe0] sm:$0xff] %v884
        %923 = vst [vmem:[%s347 + $0xe8] sm:$0xff] %v886
        %924 = vst [vmem:[%s347 + $0xf0] sm:$0xff] %v890
        %925 = vst [vmem:[%s347 + $0xf8] sm:$0xff] %v892
        %926 = vmatprep.subr.mxu0 0.0
        %927 = vmatpush1.msra.mxu0 0.0
        %928 = vmatprep.subr.mxu0 0.0
        %929 = vmatpush1.msra.mxu0 0.0
        %930 = vmatprep.subr.mxu0 0.0
        %931 = vmatpush1.msra.mxu0 0.0
        %932 = vmatprep.subr.mxu0 0.0
        %933 = vmatpush1.msra.mxu0 0.0
        %934 = vmatprep.subr.mxu0 0.0
        %935 = vmatpush1.msra.mxu0 0.0
        %936 = vmatprep.subr.mxu0 0.0
        %937 = vmatpush1.msra.mxu0 0.0
        %938 = vmatprep.subr.mxu0 0.0
        %939 = vmatpush1.msra.mxu0 0.0
        %940 = vmatprep.subr.mxu0 0.0
        %941 = vmatpush1.msra.mxu0 0.0
        %942 = vmatprep.subr.mxu0 0.0
        %943 = vmatpush1.msra.mxu0 0.0
        %944 = vmatprep.subr.mxu0 0.0
        %945 = vmatpush1.msra.mxu0 0.0
        %946 = vmatprep.subr.mxu0 0.0
        %947 = vmatpush1.msra.mxu0 0.0
        %948 = vmatprep.subr.mxu0 0.0
        %949 = vmatpush1.msra.mxu0 0.0
        %950 = vmatprep.subr.mxu0 0.0
        %951 = vmatpush1.msra.mxu0 0.0
        %952 = vmatprep.subr.mxu0 0.0
        %953 = vmatpush1.msra.mxu0 0.0
        %954 = vmatprep.subr.mxu0 %v655
        %955 = vmatpush1.msra.mxu0 %v653
        %956 = vmatprep.subr.mxu0 %v649
        %957 = vmatpush1.msra.mxu0 %v647
        %958 = vmatprep.subr.mxu0 0.0
        %959 = vmatpush2.msra.mxu0 0.0
        %960 = vmatprep.subr.mxu0 0.0
        %961 = vmatpush2.msra.mxu0 0.0
        %962 = vmatprep.subr.mxu0 0.0
        %963 = vmatpush2.msra.mxu0 0.0
        %964 = vmatprep.subr.mxu0 0.0
        %965 = vmatpush2.msra.mxu0 0.0
        %966 = vmatprep.subr.mxu0 0.0
        %967 = vmatpush2.msra.mxu0 0.0
        %968 = vmatprep.subr.mxu0 0.0
        %969 = vmatpush2.msra.mxu0 0.0
        %970 = vmatprep.subr.mxu0 0.0
        %971 = vmatpush2.msra.mxu0 0.0
        %972 = vmatprep.subr.mxu0 0.0
        %973 = vmatpush2.msra.mxu0 0.0
        %974 = vmatprep.subr.mxu0 0.0
        %975 = vmatpush2.msra.mxu0 0.0
        %976 = vmatprep.subr.mxu0 0.0
        %977 = vmatpush2.msra.mxu0 0.0
        %978 = vmatprep.subr.mxu0 0.0
        %979 = vmatpush2.msra.mxu0 0.0
        %980 = vmatprep.subr.mxu0 0.0
        %981 = vmatpush2.msra.mxu0 0.0
        %982 = vmatprep.subr.mxu0 0.0
        %983 = vmatpush2.msra.mxu0 0.0
        %984 = vmatprep.subr.mxu0 0.0
        %985 = vmatpush2.msra.mxu0 0.0
        %986 = vmatprep.subr.mxu0 0.0
        %987 = vmatpush2.msra.mxu0 0.0
        %988 = vmatprep.subr.mxu0 0.0
        %989 = vmatpush2.msra.mxu0 0.0
        %990 = vmatprep.mubr.f32.mxu0 0.0
        %991 = vmatmul.mubr.f32.gmra.mxu0 %v686
        %v992 = vpop.f32.mrf.mxu0
        %v993 = vadd.f32 0.0, %v992
        %v994 = vpop.f32.mrf.mxu0
        %v995 = vadd.f32 0.0, %v994
        %996 = vmatprep.mubr.f32.mxu0 0.0
        %997 = vmatmul.mubr.f32.gmra.mxu0 %v689
        %v998 = vpop.f32.mrf.mxu0
        %v999 = vadd.f32 0.0, %v998
        %v1000 = vpop.f32.mrf.mxu0
        %v1001 = vadd.f32 0.0, %v1000
        %1002 = vmatprep.mubr.f32.mxu0 0.0
        %1003 = vmatmul.mubr.f32.gmra.mxu0 %v692
        %v1004 = vpop.f32.mrf.mxu0
        %v1005 = vadd.f32 0.0, %v1004
        %v1006 = vpop.f32.mrf.mxu0
        %v1007 = vadd.f32 0.0, %v1006
        %1008 = vmatprep.mubr.f32.mxu0 0.0
        %1009 = vmatmul.mubr.f32.gmra.mxu0 %v695
        %v1010 = vpop.f32.mrf.mxu0
        %v1011 = vadd.f32 0.0, %v1010
        %v1012 = vpop.f32.mrf.mxu0
        %v1013 = vadd.f32 0.0, %v1012
        %1014 = vmatprep.mubr.f32.mxu0 0.0
        %1015 = vmatmul.mubr.f32.gmra.mxu0 %v698
        %v1016 = vpop.f32.mrf.mxu0
        %v1017 = vadd.f32 0.0, %v1016
        %v1018 = vpop.f32.mrf.mxu0
        %v1019 = vadd.f32 0.0, %v1018
        %1020 = vmatprep.mubr.f32.mxu0 0.0
        %1021 = vmatmul.mubr.f32.gmra.mxu0 %v701
        %v1022 = vpop.f32.mrf.mxu0
        %v1023 = vadd.f32 0.0, %v1022
        %v1024 = vpop.f32.mrf.mxu0
        %v1025 = vadd.f32 0.0, %v1024
        %1026 = vmatprep.mubr.f32.mxu0 0.0
        %1027 = vmatmul.mubr.f32.gmra.mxu0 %v704
        %v1028 = vpop.f32.mrf.mxu0
        %v1029 = vadd.f32 0.0, %v1028
        %v1030 = vpop.f32.mrf.mxu0
        %v1031 = vadd.f32 0.0, %v1030
        %1032 = vmatprep.mubr.f32.mxu0 0.0
        %1033 = vmatmul.mubr.f32.gmra.mxu0 %v707
        %v1034 = vpop.f32.mrf.mxu0
        %v1035 = vadd.f32 0.0, %v1034
        %v1036 = vpop.f32.mrf.mxu0
        %v1037 = vadd.f32 0.0, %v1036
        %1038 = vmatprep.mubr.f32.mxu0 0.0
        %1039 = vmatmul.mubr.f32.gmra.mxu0 %v710
        %v1040 = vpop.f32.mrf.mxu0
        %v1041 = vadd.f32 0.0, %v1040
        %v1042 = vpop.f32.mrf.mxu0
        %v1043 = vadd.f32 0.0, %v1042
        %1044 = vmatprep.mubr.f32.mxu0 0.0
        %1045 = vmatmul.mubr.f32.gmra.mxu0 %v713
        %v1046 = vpop.f32.mrf.mxu0
        %v1047 = vadd.f32 0.0, %v1046
        %v1048 = vpop.f32.mrf.mxu0
        %v1049 = vadd.f32 0.0, %v1048
        %1050 = vmatprep.mubr.f32.mxu0 0.0
        %1051 = vmatmul.mubr.f32.gmra.mxu0 %v716
        %v1052 = vpop.f32.mrf.mxu0
        %v1053 = vadd.f32 0.0, %v1052
        %v1054 = vpop.f32.mrf.mxu0
        %v1055 = vadd.f32 0.0, %v1054
        %1056 = vmatprep.mubr.f32.mxu0 0.0
        %1057 = vmatmul.mubr.f32.gmra.mxu0 %v719
        %v1058 = vpop.f32.mrf.mxu0
        %v1059 = vadd.f32 0.0, %v1058
        %v1060 = vpop.f32.mrf.mxu0
        %v1061 = vadd.f32 0.0, %v1060
        %1062 = vmatprep.mubr.f32.mxu0 0.0
        %1063 = vmatmul.mubr.f32.gmra.mxu0 %v722
        %v1064 = vpop.f32.mrf.mxu0
        %v1065 = vadd.f32 0.0, %v1064
        %v1066 = vpop.f32.mrf.mxu0
        %v1067 = vadd.f32 0.0, %v1066
        %1068 = vmatprep.mubr.f32.mxu0 0.0
        %1069 = vmatmul.mubr.f32.gmra.mxu0 %v725
        %v1070 = vpop.f32.mrf.mxu0
        %v1071 = vadd.f32 0.0, %v1070
        %v1072 = vpop.f32.mrf.mxu0
        %v1073 = vadd.f32 0.0, %v1072
        %1074 = vmatprep.mubr.f32.mxu0 0.0
        %1075 = vmatmul.mubr.f32.gmra.mxu0 %v728
        %v1076 = vpop.f32.mrf.mxu0
        %v1077 = vadd.f32 0.0, %v1076
        %v1078 = vpop.f32.mrf.mxu0
        %v1079 = vadd.f32 0.0, %v1078
        %1080 = vmatprep.mubr.f32.mxu0 0.0
        %1081 = vmatmul.mubr.f32.gmra.mxu0 %v731
        %v1082 = vpop.f32.mrf.mxu0
        %v1083 = vadd.f32 0.0, %v1082
        %v1084 = vpop.f32.mrf.mxu0
        %v1085 = vadd.f32 0.0, %v1084
        %1086 = vdwg.mxu0
        %s1087 = scalar_lea.vmem %s347, 256 [#allocation12]
        %1088 = vst [vmem:[%s1087] sm:$0xff] %v993
        %1089 = vst [vmem:[%s1087 + $0x8] sm:$0xff] %v995
        %1090 = vst [vmem:[%s1087 + $0x10] sm:$0xff] %v999
        %1091 = vst [vmem:[%s1087 + $0x18] sm:$0xff] %v1001
        %1092 = vst [vmem:[%s1087 + $0x20] sm:$0xff] %v1005
        %1093 = vst [vmem:[%s1087 + $0x28] sm:$0xff] %v1007
        %1094 = vst [vmem:[%s1087 + $0x30] sm:$0xff] %v1011
        %1095 = vst [vmem:[%s1087 + $0x38] sm:$0xff] %v1013
        %1096 = vst [vmem:[%s1087 + $0x40] sm:$0xff] %v1017
        %1097 = vst [vmem:[%s1087 + $0x48] sm:$0xff] %v1019
        %1098 = vst [vmem:[%s1087 + $0x50] sm:$0xff] %v1023
        %1099 = vst [vmem:[%s1087 + $0x58] sm:$0xff] %v1025
        %1100 = vst [vmem:[%s1087 + $0x60] sm:$0xff] %v1029
        %1101 = vst [vmem:[%s1087 + $0x68] sm:$0xff] %v1031
        %1102 = vst [vmem:[%s1087 + $0x70] sm:$0xff] %v1035
        %1103 = vst [vmem:[%s1087 + $0x78] sm:$0xff] %v1037
        %1104 = vst [vmem:[%s1087 + $0x80] sm:$0xff] %v1041
        %1105 = vst [vmem:[%s1087 + $0x88] sm:$0xff] %v1043
        %1106 = vst [vmem:[%s1087 + $0x90] sm:$0xff] %v1047
        %1107 = vst [vmem:[%s1087 + $0x98] sm:$0xff] %v1049
        %1108 = vst [vmem:[%s1087 + $0xa0] sm:$0xff] %v1053
        %1109 = vst [vmem:[%s1087 + $0xa8] sm:$0xff] %v1055
        %1110 = vst [vmem:[%s1087 + $0xb0] sm:$0xff] %v1059
        %1111 = vst [vmem:[%s1087 + $0xb8] sm:$0xff] %v1061
        %1112 = vst [vmem:[%s1087 + $0xc0] sm:$0xff] %v1065
        %1113 = vst [vmem:[%s1087 + $0xc8] sm:$0xff] %v1067
        %1114 = vst [vmem:[%s1087 + $0xd0] sm:$0xff] %v1071
        %1115 = vst [vmem:[%s1087 + $0xd8] sm:$0xff] %v1073
        %1116 = vst [vmem:[%s1087 + $0xe0] sm:$0xff] %v1077
        %1117 = vst [vmem:[%s1087 + $0xe8] sm:$0xff] %v1079
        %1118 = vst [vmem:[%s1087 + $0xf0] sm:$0xff] %v1083
        %1119 = vst [vmem:[%s1087 + $0xf8] sm:$0xff] %v1085
        %1120 = vmatprep.subr.mxu0 0.0
        %1121 = vmatpush1.msra.mxu0 0.0
        %1122 = vmatprep.subr.mxu0 0.0
        %1123 = vmatpush1.msra.mxu0 0.0
        %1124 = vmatprep.subr.mxu0 0.0
        %1125 = vmatpush1.msra.mxu0 0.0
        %1126 = vmatprep.subr.mxu0 0.0
        %1127 = vmatpush1.msra.mxu0 0.0
        %1128 = vmatprep.subr.mxu0 0.0
        %1129 = vmatpush1.msra.mxu0 0.0
        %1130 = vmatprep.subr.mxu0 0.0
        %1131 = vmatpush1.msra.mxu0 0.0
        %1132 = vmatprep.subr.mxu0 0.0
        %1133 = vmatpush1.msra.mxu0 0.0
        %1134 = vmatprep.subr.mxu0 0.0
        %1135 = vmatpush1.msra.mxu0 0.0
        %1136 = vmatprep.subr.mxu0 0.0
        %1137 = vmatpush1.msra.mxu0 0.0
        %1138 = vmatprep.subr.mxu0 0.0
        %1139 = vmatpush1.msra.mxu0 0.0
        %1140 = vmatprep.subr.mxu0 0.0
        %1141 = vmatpush1.msra.mxu0 0.0
        %1142 = vmatprep.subr.mxu0 0.0
        %1143 = vmatpush1.msra.mxu0 0.0
        %1144 = vmatprep.subr.mxu0 0.0
        %1145 = vmatpush1.msra.mxu0 0.0
        %1146 = vmatprep.subr.mxu0 0.0
        %1147 = vmatpush1.msra.mxu0 0.0
        %1148 = vmatprep.subr.mxu0 %v667
        %1149 = vmatpush1.msra.mxu0 %v665
        %1150 = vmatprep.subr.mxu0 %v661
        %1151 = vmatpush1.msra.mxu0 %v659
        %1152 = vmatprep.subr.mxu0 0.0
        %1153 = vmatpush2.msra.mxu0 0.0
        %1154 = vmatprep.subr.mxu0 0.0
        %1155 = vmatpush2.msra.mxu0 0.0
        %1156 = vmatprep.subr.mxu0 0.0
        %1157 = vmatpush2.msra.mxu0 0.0
        %1158 = vmatprep.subr.mxu0 0.0
        %1159 = vmatpush2.msra.mxu0 0.0
        %1160 = vmatprep.subr.mxu0 0.0
        %1161 = vmatpush2.msra.mxu0 0.0
        %1162 = vmatprep.subr.mxu0 0.0
        %1163 = vmatpush2.msra.mxu0 0.0
        %1164 = vmatprep.subr.mxu0 0.0
        %1165 = vmatpush2.msra.mxu0 0.0
        %1166 = vmatprep.subr.mxu0 0.0
        %1167 = vmatpush2.msra.mxu0 0.0
        %1168 = vmatprep.subr.mxu0 0.0
        %1169 = vmatpush2.msra.mxu0 0.0
        %1170 = vmatprep.subr.mxu0 0.0
        %1171 = vmatpush2.msra.mxu0 0.0
        %1172 = vmatprep.subr.mxu0 0.0
        %1173 = vmatpush2.msra.mxu0 0.0
        %1174 = vmatprep.subr.mxu0 0.0
        %1175 = vmatpush2.msra.mxu0 0.0
        %1176 = vmatprep.subr.mxu0 0.0
        %1177 = vmatpush2.msra.mxu0 0.0
        %1178 = vmatprep.subr.mxu0 0.0
        %1179 = vmatpush2.msra.mxu0 0.0
        %1180 = vmatprep.subr.mxu0 0.0
        %1181 = vmatpush2.msra.mxu0 0.0
        %1182 = vmatprep.subr.mxu0 0.0
        %1183 = vmatpush2.msra.mxu0 0.0
        %1184 = vmatprep.mubr.f32.mxu0 0.0
        %1185 = vmatmul.mubr.f32.gmra.mxu0 %v686
        %v1186 = vpop.f32.mrf.mxu0
        %v1187 = vadd.f32 0.0, %v1186
        %v1188 = vpop.f32.mrf.mxu0
        %v1189 = vadd.f32 0.0, %v1188
        %1190 = vmatprep.mubr.f32.mxu0 0.0
        %1191 = vmatmul.mubr.f32.gmra.mxu0 %v689
        %v1192 = vpop.f32.mrf.mxu0
        %v1193 = vadd.f32 0.0, %v1192
        %v1194 = vpop.f32.mrf.mxu0
        %v1195 = vadd.f32 0.0, %v1194
        %1196 = vmatprep.mubr.f32.mxu0 0.0
        %1197 = vmatmul.mubr.f32.gmra.mxu0 %v692
        %v1198 = vpop.f32.mrf.mxu0
        %v1199 = vadd.f32 0.0, %v1198
        %v1200 = vpop.f32.mrf.mxu0
        %v1201 = vadd.f32 0.0, %v1200
        %1202 = vmatprep.mubr.f32.mxu0 0.0
        %1203 = vmatmul.mubr.f32.gmra.mxu0 %v695
        %v1204 = vpop.f32.mrf.mxu0
        %v1205 = vadd.f32 0.0, %v1204
        %v1206 = vpop.f32.mrf.mxu0
        %v1207 = vadd.f32 0.0, %v1206
        %1208 = vmatprep.mubr.f32.mxu0 0.0
        %1209 = vmatmul.mubr.f32.gmra.mxu0 %v698
        %v1210 = vpop.f32.mrf.mxu0
        %v1211 = vadd.f32 0.0, %v1210
        %v1212 = vpop.f32.mrf.mxu0
        %v1213 = vadd.f32 0.0, %v1212
        %1214 = vmatprep.mubr.f32.mxu0 0.0
        %1215 = vmatmul.mubr.f32.gmra.mxu0 %v701
        %v1216 = vpop.f32.mrf.mxu0
        %v1217 = vadd.f32 0.0, %v1216
        %v1218 = vpop.f32.mrf.mxu0
        %v1219 = vadd.f32 0.0, %v1218
        %1220 = vmatprep.mubr.f32.mxu0 0.0
        %1221 = vmatmul.mubr.f32.gmra.mxu0 %v704
        %v1222 = vpop.f32.mrf.mxu0
        %v1223 = vadd.f32 0.0, %v1222
        %v1224 = vpop.f32.mrf.mxu0
        %v1225 = vadd.f32 0.0, %v1224
        %1226 = vmatprep.mubr.f32.mxu0 0.0
        %1227 = vmatmul.mubr.f32.gmra.mxu0 %v707
        %v1228 = vpop.f32.mrf.mxu0
        %v1229 = vadd.f32 0.0, %v1228
        %v1230 = vpop.f32.mrf.mxu0
        %v1231 = vadd.f32 0.0, %v1230
        %1232 = vmatprep.mubr.f32.mxu0 0.0
        %1233 = vmatmul.mubr.f32.gmra.mxu0 %v710
        %v1234 = vpop.f32.mrf.mxu0
        %v1235 = vadd.f32 0.0, %v1234
        %v1236 = vpop.f32.mrf.mxu0
        %v1237 = vadd.f32 0.0, %v1236
        %1238 = vmatprep.mubr.f32.mxu0 0.0
        %1239 = vmatmul.mubr.f32.gmra.mxu0 %v713
        %v1240 = vpop.f32.mrf.mxu0
        %v1241 = vadd.f32 0.0, %v1240
        %v1242 = vpop.f32.mrf.mxu0
        %v1243 = vadd.f32 0.0, %v1242
        %1244 = vmatprep.mubr.f32.mxu0 0.0
        %1245 = vmatmul.mubr.f32.gmra.mxu0 %v716
        %v1246 = vpop.f32.mrf.mxu0
        %v1247 = vadd.f32 0.0, %v1246
        %v1248 = vpop.f32.mrf.mxu0
        %v1249 = vadd.f32 0.0, %v1248
        %1250 = vmatprep.mubr.f32.mxu0 0.0
        %1251 = vmatmul.mubr.f32.gmra.mxu0 %v719
        %v1252 = vpop.f32.mrf.mxu0
        %v1253 = vadd.f32 0.0, %v1252
        %v1254 = vpop.f32.mrf.mxu0
        %v1255 = vadd.f32 0.0, %v1254
        %1256 = vmatprep.mubr.f32.mxu0 0.0
        %1257 = vmatmul.mubr.f32.gmra.mxu0 %v722
        %v1258 = vpop.f32.mrf.mxu0
        %v1259 = vadd.f32 0.0, %v1258
        %v1260 = vpop.f32.mrf.mxu0
        %v1261 = vadd.f32 0.0, %v1260
        %1262 = vmatprep.mubr.f32.mxu0 0.0
        %1263 = vmatmul.mubr.f32.gmra.mxu0 %v725
        %v1264 = vpop.f32.mrf.mxu0
        %v1265 = vadd.f32 0.0, %v1264
        %v1266 = vpop.f32.mrf.mxu0
        %v1267 = vadd.f32 0.0, %v1266
        %1268 = vmatprep.mubr.f32.mxu0 0.0
        %1269 = vmatmul.mubr.f32.gmra.mxu0 %v728
        %v1270 = vpop.f32.mrf.mxu0
        %v1271 = vadd.f32 0.0, %v1270
        %v1272 = vpop.f32.mrf.mxu0
        %v1273 = vadd.f32 0.0, %v1272
        %1274 = vmatprep.mubr.f32.mxu0 0.0
        %1275 = vmatmul.mubr.f32.gmra.mxu0 %v731
        %v1276 = vpop.f32.mrf.mxu0
        %v1277 = vadd.f32 0.0, %v1276
        %v1278 = vpop.f32.mrf.mxu0
        %v1279 = vadd.f32 0.0, %v1278
        %1280 = vdwg.mxu0
        %s1281 = scalar_lea.vmem %s347, 512 [#allocation12]
        %1282 = vst [vmem:[%s1281] sm:$0xff] %v1187
        %1283 = vst [vmem:[%s1281 + $0x8] sm:$0xff] %v1189
        %1284 = vst [vmem:[%s1281 + $0x10] sm:$0xff] %v1193
        %1285 = vst [vmem:[%s1281 + $0x18] sm:$0xff] %v1195
        %1286 = vst [vmem:[%s1281 + $0x20] sm:$0xff] %v1199
        %1287 = vst [vmem:[%s1281 + $0x28] sm:$0xff] %v1201
        %1288 = vst [vmem:[%s1281 + $0x30] sm:$0xff] %v1205
        %1289 = vst [vmem:[%s1281 + $0x38] sm:$0xff] %v1207
        %1290 = vst [vmem:[%s1281 + $0x40] sm:$0xff] %v1211
        %1291 = vst [vmem:[%s1281 + $0x48] sm:$0xff] %v1213
        %1292 = vst [vmem:[%s1281 + $0x50] sm:$0xff] %v1217
        %1293 = vst [vmem:[%s1281 + $0x58] sm:$0xff] %v1219
        %1294 = vst [vmem:[%s1281 + $0x60] sm:$0xff] %v1223
        %1295 = vst [vmem:[%s1281 + $0x68] sm:$0xff] %v1225
        %1296 = vst [vmem:[%s1281 + $0x70] sm:$0xff] %v1229
        %1297 = vst [vmem:[%s1281 + $0x78] sm:$0xff] %v1231
        %1298 = vst [vmem:[%s1281 + $0x80] sm:$0xff] %v1235
        %1299 = vst [vmem:[%s1281 + $0x88] sm:$0xff] %v1237
        %1300 = vst [vmem:[%s1281 + $0x90] sm:$0xff] %v1241
        %1301 = vst [vmem:[%s1281 + $0x98] sm:$0xff] %v1243
        %1302 = vst [vmem:[%s1281 + $0xa0] sm:$0xff] %v1247
        %1303 = vst [vmem:[%s1281 + $0xa8] sm:$0xff] %v1249
        %1304 = vst [vmem:[%s1281 + $0xb0] sm:$0xff] %v1253
        %1305 = vst [vmem:[%s1281 + $0xb8] sm:$0xff] %v1255
        %1306 = vst [vmem:[%s1281 + $0xc0] sm:$0xff] %v1259
        %1307 = vst [vmem:[%s1281 + $0xc8] sm:$0xff] %v1261
        %1308 = vst [vmem:[%s1281 + $0xd0] sm:$0xff] %v1265
        %1309 = vst [vmem:[%s1281 + $0xd8] sm:$0xff] %v1267
        %1310 = vst [vmem:[%s1281 + $0xe0] sm:$0xff] %v1271
        %1311 = vst [vmem:[%s1281 + $0xe8] sm:$0xff] %v1273
        %1312 = vst [vmem:[%s1281 + $0xf0] sm:$0xff] %v1277
        %1313 = vst [vmem:[%s1281 + $0xf8] sm:$0xff] %v1279
        %s1314 = sand.u32 %s184, 1
        %s1315 = scalar_lea.sflag [#allocation4], %s1314
        %s1316 = sand.u32 %s184, 1
        %s1317 = smul.addr %s1316, 768
        %s1318 = scalar_lea.vmem [#allocation12], %s1317
        // Predicated region
        $region65: #{tpu_custom_call.1} parent=43 // pred_check
          %p1319 = pneg %p194
        $region66: #{tpu_custom_call.1} parent=43 // pred_check_branch
          %1321 = sbr.rel (%p1319) target = $region68
        $region67: #{tpu_custom_call.1} parent=43 // pred_region
          #allocation14 [shape = 'u32[6]{0}', space=smem, size = 0x18, scoped, tag = 'DMA stride descriptor']
          %s1322 = smul.u32 16, %s31
          %s1324 = ssub.s32 12288, 12288
          %1325 = vsyncadd %s1315, %s1324
          %s1326 = smul.addr %s1322, 2
          %s1327 = smul.addr %s30, 192
          %s1328 = sadd.s32 %s1326, %s1327
          %s1329 = smul.addr %s1328, 128
          %s1330 = scalar_lea.hbm %s6, %s1329
          %s1332 = sshll.u32 1, 14
          %s1333 = sxor.u32 4294967295, %s1332
          %s1336 = sshll.u32 7, 18
          %s1337 = sxor.u32 4294967295, %s1336
          %s1338 = sand.u32 0, %s1337
          %s1340 = sor.u32 %s1338, 0
          %s1341 = sshll.u32 %s1318, 4
          %s1342 = int_to_ptr.vmem [resolvable:$true] %s1341
          %1348 = sst [smem:[#allocation14]] 4096
          %s1349 = scalar_lea.smem [#allocation14], 1
          %1350 = sst [smem:[%s1349]] 8192
          %s1351 = scalar_lea.smem [#allocation14], 2
          %1352 = sst [smem:[%s1351]] 16
          %s1353 = scalar_lea.smem [#allocation14], 3
          %1354 = sst [smem:[%s1353]] 256
          %s1355 = scalar_lea.smem [#allocation14], 4
          %1356 = sst [smem:[%s1355]] 256
          %s1357 = scalar_lea.smem [#allocation14], 5
          %1358 = sst [smem:[%s1357]] 16
          %1360 = dma.general %s1342, 12288, %s1330, %s1315, 131072, [#allocation14], %s1340, 0
        $region68: #{tpu_custom_call.1} parent=43 // pred_fallthru
          _
      $region44: #{tpu_custom_call.1} parent=5 // pred_fallthru
        _
      %p1361 = scmp.le.s32.totalorder 2, %s21
      // Predicated region
      $region69: #{tpu_custom_call.1} parent=5 // pred_check
        %p1362 = pneg %p1361
      $region70: #{tpu_custom_call.1} parent=5 // pred_check_branch
        %1364 = sbr.rel (%p1362) target = $region72
      $region71: #{tpu_custom_call.1} parent=5 // pred_region
        %s1365 = ssub.s32 %s21, 2
        // Predicated region
        $region73: #{tpu_custom_call.1} parent=71 // pred_check
          %p1366 = pneg %p200
        $region74: #{tpu_custom_call.1} parent=71 // pred_check_branch
          %1368 = sbr.rel (%p1366) target = $region76
        $region75: #{tpu_custom_call.1} parent=71 // pred_region
          %s1369 = sand.u32 %s185, 1
          %s1370 = scalar_lea.sflag [#allocation4], %s1369
          %s1371 = sand.u32 %s185, 1
          %s1372 = smul.addr %s1371, 768
          %s1373 = scalar_lea.vmem [#allocation12], %s1372
          %1374 = dma.done %s1370, 12288
        $region76: #{tpu_custom_call.1} parent=71 // pred_fallthru
          _
      $region72: #{tpu_custom_call.1} parent=5 // pred_fallthru
        _
    $region6: #{tpu_custom_call.1} parent=1 // loop_footer
      %s25 = sadd.s32 1, %s21
    $region7: #{tpu_custom_call.1} parent=1 // loop_footer_branch
      %20 = sbr.rel target = $region3
    $region8: #{tpu_custom_call.1} parent=1 // loop_exit
      _
    %1375 = vsyncpa [#allocation3], 1
    %s1376 = scalar_lea.sflag [#allocation3], 1
    %1377 = vsyncpa %s1376, 1
    %1378 = vsyncpa [#allocation11], 1
    %1379 = vsyncpa [#allocation4], 1
    %s1380 = scalar_lea.sflag [#allocation4], 1
    %1381 = vsyncpa %s1380, 1
    %1382 = vsyncpa [#allocation5], 1
    %s1383 = scalar_lea.sflag [#allocation5], 1
    %1384 = vsyncpa %s1383, 1
    %1385 = vsyncpa [#allocation7], 1

</llo_original>
